<compile_context>
chip_gen: v6e
topology: v6e:2x2x1
jax: 0.10.0
libtpu: 0.0.40
codegen_flags: <defaults>
</compile_context>

<pallas_src>
import jax
import jax.numpy as jnp
from jax.experimental import pallas as pl
from jax.experimental.pallas import tpu as pltpu


# --------------------------------------------------------------------------- #
# Kernel
# --------------------------------------------------------------------------- #
def _softmax_kernel(x_ref, o_ref):
    # x_ref / o_ref: (block_rows, cols) tile in VMEM.
    x = x_ref[...].astype(jnp.float32)
    m = jnp.max(x, axis=-1, keepdims=True)
    e = jnp.exp(x - m)
    s = jnp.sum(e, axis=-1, keepdims=True)
    # EUP approximate reciprocal + one Newton step (restores ~f32 accuracy).
    # This is VPU/EUP work fully hidden under the HBM DMA; leave it simple.
    r = pl.reciprocal(s, approx=True)
    r = r * (2.0 - s * r)
    o_ref[...] = (e * r).astype(o_ref.dtype)


# --------------------------------------------------------------------------- #
# Tiling helpers
# --------------------------------------------------------------------------- #
def _vmem_budget_bytes():
    """Per-generation budget for the pipelined tiles + f32 intermediates."""
    try:
        kind = jax.devices()[0].device_kind.lower()
    except Exception:  # pragma: no cover - defensive
        kind = ""
    if "v7" in kind:
        # 64 MiB physical VMEM per TC, 32 MiB scoped default: leave headroom.
        return 24 * 1024 * 1024
    if "v6" in kind:
        # 128 MiB physical, 32 MiB scoped default: use most of it.
        return 28 * 1024 * 1024
    # v5e (16 MiB scoped default) and unknown chips: conservative.
    return 12 * 1024 * 1024


def _sublane_multiple(itemsize):
    # Native packed sublane tile per dtype width: f32 -> 8, bf16 -> 16, i8 -> 32.
    return {4: 8, 2: 16, 1: 32}.get(itemsize, 8)


def _pick_block_rows(rows, cols, itemsize, budget_bytes):
    """Pick block_rows such that:
      (a) it is a multiple of the dtype sublane tile OR equals `rows`,
      (b) the resident VMEM footprint fits `budget_bytes`,
      (c) there are >= 2 grid steps when possible (megacore sharding on v7x,
          DMA/compute overlap on all chips).
    The wrapper pads rows if the returned block does not divide `rows`.
    """
    sub = _sublane_multiple(itemsize)
    # Per-row resident bytes:
    #   input + output tiles, each double-buffered  -> 4 * cols * itemsize
    #   f32 intermediates (upcast x, materialized e) -> 2 * cols * 4
    per_row_bytes = cols * itemsize * 4 + 2 * cols * 4
    vmem_rows = max(sub, budget_bytes // max(per_row_bytes, 1))
    # Prefer >= 2 grid steps; the extra ~0.35 us step on 1-TC chips is noise.
    cap = min(vmem_rows, max(sub, rows // 2))

    # Largest sublane-multiple divisor of rows that fits the cap.
    best = None
    br = sub
    while br <= min(cap, rows):
        if rows % br == 0:
            best = br
        br += sub
    if best is not None:
        return best

    # No sublane-multiple divisor fits.  Take the full rows if it fits the
    # budget (full-extent blocks are always legal); otherwise the largest
    # sublane multiple within the cap (wrapper pads rows up to a multiple).
    if rows * per_row_bytes <= budget_bytes and rows >= 1:
        return rows
    return max(sub, (cap // sub) * sub)


# --------------------------------------------------------------------------- #
# Wrapper
# --------------------------------------------------------------------------- #
def pallas_softmax_lastdim(x):
    """Numerically-stable softmax along the last axis via a Pallas TPU kernel."""
    orig_shape = x.shape
    cols = orig_shape[-1]
    rows = 1
    for d in orig_shape[:-1]:
        rows *= d
    x2 = x.reshape(rows, cols)

    itemsize = jnp.dtype(x.dtype).itemsize

    # Keep the softmax axis lane-dense: pad cols up to a multiple of 128 with a
    # very negative value (contributes exp(...) == 0, so the result is exact).
    cols_p = ((cols + 127) // 128) * 128
    if cols_p != cols:
        x2 = jnp.pad(x2, ((0, 0), (0, cols_p - cols)), constant_values=-1e30)

    budget = _vmem_budget_bytes()
    br = _pick_block_rows(rows, cols_p, itemsize, budget)

    # Pad rows so the block divides evenly (padded rows are computed but sliced
    # away; keeps every block full-size and unmasked).
    rows_p = ((rows + br - 1) // br) * br
    if rows_p != rows:
        x2 = jnp.pad(x2, ((0, rows_p - rows), (0, 0)))

    grid = rows_p // br

    cost = pl.CostEstimate(
        flops=5 * rows_p * cols_p,
        transcendentals=rows_p * cols_p,
        bytes_accessed=2 * rows_p * cols_p * itemsize,
    )

    out2 = pl.pallas_call(
        _softmax_kernel,
        out_shape=jax.ShapeDtypeStruct((rows_p, cols_p), x.dtype),
        grid_spec=pltpu.PrefetchScalarGridSpec(
            num_scalar_prefetch=0,
            grid=(grid,),
            in_specs=[pl.BlockSpec((br, cols_p), lambda i: (i, 0))],
            out_specs=pl.BlockSpec((br, cols_p), lambda i: (i, 0)),
        ),
        compiler_params=pltpu.CompilerParams(
            # Row-block axis is independent: shardable across v7x's two TCs.
            dimension_semantics=("parallel",),
            # Explicit scoped-VMEM limit sized to the per-generation budget
            # (+ headroom for compiler scratch / f32 intermediates).
            vmem_limit_bytes=budget + 4 * 1024 * 1024,
        ),
        cost_estimate=cost,
    )(x2)

    if rows_p != rows or cols_p != cols:
        out2 = out2[:rows, :cols]
    return out2.reshape(orig_shape)


# --------------------------------------------------------------------------- #
# Main
# --------------------------------------------------------------------------- #
if __name__ == "__main__":
    key = jax.random.PRNGKey(0)
    # Same layout as the PyTorch module's input: [1, 4, 384, 384]
    x388 = jax.random.normal(key, (1, 4, 384, 384), dtype=jnp.float32)

    out = pallas_softmax_lastdim(x388)
    out = jax.block_until_ready(out)

    # Sanity check against the plain-JAX reference.
    ref = jax.nn.softmax(x388, axis=-1)
    assert out.shape == x388.shape
    assert out.dtype == x388.dtype
    assert jnp.max(jnp.abs(out - ref)) < 1e-5

    print("KERNEL_OK")
</pallas_src>

<mosaic_0001>
module attributes {stable_mosaic.version = 11 : i64} {
  func.func @_softmax_kernel(%arg0: i32, %arg1: memref<768x384xf32, #tpu.memory_space<vmem>>, %arg2: memref<768x384xf32, #tpu.memory_space<vmem>>) attributes {dimension_semantics = [#tpu.dimension_semantics<parallel>], iteration_bounds = array<i64: 2>, scalar_prefetch = 0 : i64, scratch_operands = 0 : i64, tpu.core_type = #tpu.core_type<tc>, window_params = [{transform_indices = @transform_0, window_bounds = array<i64: 768, 384>}, {transform_indices = @transform_1, window_bounds = array<i64: 768, 384>}]} {
    %c0 = arith.constant 0 : index
    %c0_0 = arith.constant 0 : index
    %0 = vector.load %arg1[%c0, %c0_0] : memref<768x384xf32, #tpu.memory_space<vmem>>, vector<768x384xf32>
    %cst = arith.constant dense<0xFF800000> : vector<768xf32>
    %1 = vector.multi_reduction <maximumf>, %0, %cst [1] : vector<768x384xf32> to vector<768xf32>
    %2 = vector.shape_cast %1 : vector<768xf32> to vector<768x1xf32>
    %3 = vector.broadcast %2 : vector<768x1xf32> to vector<768x384xf32>
    %4 = arith.subf %0, %3 : vector<768x384xf32>
    %5 = math.exp %4 : vector<768x384xf32>
    %cst_1 = arith.constant dense<0.000000e+00> : vector<768xf32>
    %6 = vector.multi_reduction <add>, %5, %cst_1 [1] : vector<768x384xf32> to vector<768xf32>
    %7 = vector.shape_cast %6 : vector<768xf32> to vector<768x1xf32>
    %8 = tpu.reciprocal %7 {approx = true} : vector<768x1xf32> -> vector<768x1xf32>
    %9 = arith.mulf %7, %8 : vector<768x1xf32>
    %cst_2 = arith.constant 2.000000e+00 : f32
    %10 = vector.broadcast %cst_2 : f32 to vector<768x1xf32>
    %11 = arith.subf %10, %9 : vector<768x1xf32>
    %12 = arith.mulf %8, %11 : vector<768x1xf32>
    %13 = vector.broadcast %12 : vector<768x1xf32> to vector<768x384xf32>
    %14 = arith.mulf %5, %13 : vector<768x384xf32>
    %c0_3 = arith.constant 0 : index
    %c0_4 = arith.constant 0 : index
    %15 = vector.load %arg2[%c0_3, %c0_4] : memref<768x384xf32, #tpu.memory_space<vmem>>, vector<768x384xf32>
    tpu.vector_store %arg2[%c0_3, %c0_4], %14 {strides = array<i32>} : memref<768x384xf32, #tpu.memory_space<vmem>>, vector<768x384xf32>,
    return
  }
  func.func @transform_0(%arg0: i32) -> (i32, i32) {
    %c0_i32 = arith.constant 0 : i32
    %c0_i32_0 = arith.constant 0 : i32
    return %arg0, %c0_i32 : i32, i32
  }
  func.func @transform_1(%arg0: i32) -> (i32, i32) {
    %c0_i32 = arith.constant 0 : i32
    %c0_i32_0 = arith.constant 0 : i32
    return %arg0, %c0_i32 : i32, i32
  }
}

</mosaic_0001>

<llo_original>
// kernel: tpu_custom_call.1
$region0: #{tpu_custom_call.1}
  #allocation0 [shape = 'u32[]', space=smem, size = 0x4, offset = 0x4, fixed_abs, tag = 'smem constant byte address 0x4 - core index']
  #allocation1 [shape = 'u32[144,128]{1,0:T(1,128)}', space=vmem, size = 0x12000, scoped, tag = 'internal scratch']
  %s0 = inlined_call_operand.hbm [shape: f32[1536,384], index: 0, kind: input, shape index: {}]
  %s1 = inlined_call_operand.hbm [shape: f32[1536,384], index: 1, kind: output, shape index: {}]
  %s2 = sld [smem:[#allocation0]]
  $region41: #{tpu_custom_call.1} parent=0
    _
  %s4 = ssub.s32 1, %s2
  %s5 = scalar_select 0, %s4, %s2
  $region1: #{tpu_custom_call.1} parent=0
    #allocation2 [shape = 'u8[2359296]{0}', space=vmem, size = 0x240000, scoped, tag = 'input window, operand 0']
    #allocation3 [shape = 's32[2]{0}', space=sflag, size = 0x8, scoped, tag = 'scoped memory for tpu_custom_call.1']
    #allocation4 [shape = 's32[2]{0}', space=sflag, size = 0x8, scoped, tag = 'scoped memory for tpu_custom_call.1']
    #allocation5 [shape = 'u8[2359296]{0}', space=vmem, size = 0x240000, scoped, tag = 'output window, operand 0']
    %6 = vsyncpa [#allocation3], 0
    %s7 = scalar_lea.sflag [#allocation3], 1
    %8 = vsyncpa %s7, 0
    %9 = vsyncpa [#allocation4], 0
    %s10 = scalar_lea.sflag [#allocation4], 1
    %11 = vsyncpa %s10, 0
    loop: start=0, step=1, limit=4
    $region2: #{tpu_custom_call.1} parent=1 // loop_pre_header
      _
    $region3: #{tpu_custom_call.1} parent=1 // loop_header
      %s13 = sphi 0, %s17
      %p14 = scmp.ge.s32.totalorder %s13, 4
      %s23 = sphi 0, %s25
      %s26 = sphi 0, %s23
      %s27 = sphi 0, %s26
      %s43 = sphi 0, %s27
      %s49 = sphi 0, %s51
      %s52 = sphi 0, %s49
      %s53 = sphi 0, %s52
      %s69 = sphi 0, %s53
    $region4: #{tpu_custom_call.1} parent=1 // loop_header_branch
      %16 = sbr.rel (%p14) target = $region8
    $region5: #{tpu_custom_call.1} parent=1 // loop_body
      %s18 = ssub.s32 %s13, 1
      %s19 = ssub.s32 %s13, 2
      %s20 = sadd.s32 %s13, 1
      %s21 = ssub.s32 %s13, %s20
      %p22 = scmp.eq.s32.totalorder %s21, 0
      %s24 = sadd.s32 %s23, 1
      %s25 = scalar_select %p22, %s23, %s24
      %p28 = pneg %p22
      %p29 = scmp.eq.s32.totalorder %s13, 1
      %p30 = por %p28, %p29
      %p31 = scmp.ne.s32.totalorder %s23, %s26
      %p32 = scmp.eq.s32.totalorder %s13, 0
      %p33 = por %p31, %p32
      %p34 = scmp.ne.s32.totalorder %s23, %s26
      %p35 = scmp.eq.s32.totalorder %s18, 1
      %p36 = por %p34, %p35
      %p37 = scmp.ne.s32.totalorder %s26, %s27
      %p38 = scmp.eq.s32.totalorder %s18, 0
      %p39 = por %p37, %p38
      %p40 = scmp.ne.s32.totalorder %s26, %s27
      %p41 = scmp.eq.s32.totalorder %s19, 1
      %p42 = por %p40, %p41
      %p44 = scmp.ne.s32.totalorder %s27, %s43
      %p45 = scmp.eq.s32.totalorder %s19, 0
      %p46 = por %p44, %p45
      %s47 = ssub.s32 %s13, %s20
      %p48 = scmp.eq.s32.totalorder %s47, 0
      %s50 = sadd.s32 %s49, 1
      %s51 = scalar_select %p48, %s49, %s50
      %p54 = pneg %p48
      %p55 = scmp.eq.s32.totalorder %s13, 1
      %p56 = por %p54, %p55
      %p57 = scmp.ne.s32.totalorder %s49, %s52
      %p58 = scmp.eq.s32.totalorder %s13, 0
      %p59 = por %p57, %p58
      %p60 = scmp.ne.s32.totalorder %s49, %s52
      %p61 = scmp.eq.s32.totalorder %s18, 1
      %p62 = por %p60, %p61
      %p63 = scmp.ne.s32.totalorder %s52, %s53
      %p64 = scmp.eq.s32.totalorder %s18, 0
      %p65 = por %p63, %p64
      %p66 = scmp.ne.s32.totalorder %s52, %s53
      %p67 = scmp.eq.s32.totalorder %s19, 1
      %p68 = por %p66, %p67
      %p70 = scmp.ne.s32.totalorder %s53, %s69
      %p71 = scmp.eq.s32.totalorder %s19, 0
      %p72 = por %p70, %p71
      %p73 = scmp.le.s32.totalorder 1, %s13
      %p74 = scmp.lt.s32.totalorder %s13, 3
      %p75 = pnand %p73, %p74
      %p76 = pneg %p75
      // Predicated region
      $region9: #{tpu_custom_call.1} parent=5 // pred_check
        _
      $region10: #{tpu_custom_call.1} parent=5 // pred_check_branch
        %78 = sbr.rel (%p75) target = $region12
      $region11: #{tpu_custom_call.1} parent=5 // pred_region
        %s79 = ssub.s32 %s13, 1
      $region12: #{tpu_custom_call.1} parent=5 // pred_fallthru
        _
      %p80 = scmp.lt.s32.totalorder %s13, 2
      // Predicated region
      $region13: #{tpu_custom_call.1} parent=5 // pred_check
        %p81 = pneg %p80
      $region14: #{tpu_custom_call.1} parent=5 // pred_check_branch
        %83 = sbr.rel (%p81) target = $region16
      $region15: #{tpu_custom_call.1} parent=5 // pred_region
        // Predicated region
        $region17: #{tpu_custom_call.1} parent=15 // pred_check
          %p84 = pneg %p33
        $region18: #{tpu_custom_call.1} parent=15 // pred_check_branch
          %86 = sbr.rel (%p84) target = $region20
        $region19: #{tpu_custom_call.1} parent=15 // pred_region
          %s87 = sand.u32 %s23, 1
          %s88 = scalar_lea.sflag [#allocation3], %s87
          %s89 = sand.u32 %s23, 1
          %s90 = smul.addr %s89, 2304
          %s91 = scalar_lea.vmem [#allocation2], %s90
          %s92 = smul.u32 96, %s13
          %s94 = ssub.s32 36864, 36864
          %95 = vsyncadd %s88, %s94
          %s96 = smul.addr %s92, 3
          %s97 = smul.addr %s96, 128
          %s98 = scalar_lea.hbm %s0, %s97
          %s99 = sshll.u32 %s91, 4
          %s100 = int_to_ptr.vmem [resolvable:$true] %s99
          %105 = dma.hbm_to_vmem [thread:$0]  %s98, 36864, %s100, %s88, 384, 384, 24
        $region20: #{tpu_custom_call.1} parent=15 // pred_fallthru
          _
      $region16: #{tpu_custom_call.1} parent=5 // pred_fallthru
        _
      %p106 = scmp.le.s32.totalorder 1, %s13
      %p107 = scmp.lt.s32.totalorder %s13, 3
      %p108 = pnand %p106, %p107
      %p109 = pneg %p108
      // Predicated region
      $region21: #{tpu_custom_call.1} parent=5 // pred_check
        _
      $region22: #{tpu_custom_call.1} parent=5 // pred_check_branch
        %111 = sbr.rel (%p108) target = $region24
      $region23: #{tpu_custom_call.1} parent=5 // pred_region
        %s112 = ssub.s32 %s13, 1
        %s113 = sand.u32 %s26, 1
        %s114 = scalar_lea.sflag [#allocation3], %s113
        %s115 = sand.u32 %s26, 1
        %s116 = smul.addr %s115, 2304
        %s117 = scalar_lea.vmem [#allocation2], %s116
        // Predicated region
        $region25: #{tpu_custom_call.1} parent=23 // pred_check
          %p118 = pneg %p39
        $region26: #{tpu_custom_call.1} parent=23 // pred_check_branch
          %120 = sbr.rel (%p118) target = $region28
        $region27: #{tpu_custom_call.1} parent=23 // pred_region
          %121 = dma.done %s114, 36864
        $region28: #{tpu_custom_call.1} parent=23 // pred_fallthru
          _
        %s122 = sand.u32 %s26, 1
        %s123 = scalar_lea.sflag [#allocation3], %s122
        %s124 = sand.u32 %s26, 1
        %s125 = smul.addr %s124, 2304
        %s126 = scalar_lea.vmem [#allocation2], %s125
        %p127 = pneg %p39
        %p128 = pneg %p36
        %p129 = pneg %p65
        %p130 = pneg %p62
        %s131 = sand.u32 %s52, 1
        %s132 = scalar_lea.sflag [#allocation4], %s131
        %s133 = sand.u32 %s52, 1
        %s134 = smul.addr %s133, 2304
        %s135 = scalar_lea.vmem [#allocation5], %s134
        %s136 = smul.u32 96, %s18
        %s137 = smul.u32 96, %s18
        %v138 = vld [vmem:[%s117] sm:$0xff]
        %v139 = vld [vmem:[%s117 + $0x8] sm:$0xff]
        %v140 = vld [vmem:[%s117 + $0x10] sm:$0xff]
        %v141 = vld [vmem:[%s117 + $0x18] sm:$0xff]
        %v142 = vld [vmem:[%s117 + $0x20] sm:$0xff]
        %v143 = vld [vmem:[%s117 + $0x28] sm:$0xff]
        %v144 = vld [vmem:[%s117 + $0x30] sm:$0xff]
        %v145 = vld [vmem:[%s117 + $0x38] sm:$0xff]
        %v146 = vld [vmem:[%s117 + $0x40] sm:$0xff]
        %v147 = vld [vmem:[%s117 + $0x48] sm:$0xff]
        %v148 = vld [vmem:[%s117 + $0x50] sm:$0xff]
        %v149 = vld [vmem:[%s117 + $0x58] sm:$0xff]
        %v150 = vld [vmem:[%s117 + $0x60] sm:$0xff]
        %v151 = vld [vmem:[%s117 + $0x68] sm:$0xff]
        %v152 = vld [vmem:[%s117 + $0x70] sm:$0xff]
        %v153 = vld [vmem:[%s117 + $0x78] sm:$0xff]
        %v154 = vld [vmem:[%s117 + $0x80] sm:$0xff]
        %v155 = vld [vmem:[%s117 + $0x88] sm:$0xff]
        %v156 = vld [vmem:[%s117 + $0x90] sm:$0xff]
        %v157 = vld [vmem:[%s117 + $0x98] sm:$0xff]
        %v158 = vld [vmem:[%s117 + $0xa0] sm:$0xff]
        %v159 = vld [vmem:[%s117 + $0xa8] sm:$0xff]
        %v160 = vld [vmem:[%s117 + $0xb0] sm:$0xff]
        %v161 = vld [vmem:[%s117 + $0xb8] sm:$0xff]
        %v162 = vld [vmem:[%s117 + $0xc0] sm:$0xff]
        %v163 = vld [vmem:[%s117 + $0xc8] sm:$0xff]
        %v164 = vld [vmem:[%s117 + $0xd0] sm:$0xff]
        %v165 = vld [vmem:[%s117 + $0xd8] sm:$0xff]
        %v166 = vld [vmem:[%s117 + $0xe0] sm:$0xff]
        %v167 = vld [vmem:[%s117 + $0xe8] sm:$0xff]
        %v168 = vld [vmem:[%s117 + $0xf0] sm:$0xff]
        %v169 = vld [vmem:[%s117 + $0xf8] sm:$0xff]
        %v170 = vld [vmem:[%s117 + $0x100] sm:$0xff]
        %v171 = vld [vmem:[%s117 + $0x108] sm:$0xff]
        %v172 = vld [vmem:[%s117 + $0x110] sm:$0xff]
        %v173 = vld [vmem:[%s117 + $0x118] sm:$0xff]
        %v174 = vld [vmem:[%s117 + $0x120] sm:$0xff]
        %v175 = vld [vmem:[%s117 + $0x128] sm:$0xff]
        %v176 = vld [vmem:[%s117 + $0x130] sm:$0xff]
        %v177 = vld [vmem:[%s117 + $0x138] sm:$0xff]
        %v178 = vld [vmem:[%s117 + $0x140] sm:$0xff]
        %v179 = vld [vmem:[%s117 + $0x148] sm:$0xff]
        %v180 = vld [vmem:[%s117 + $0x150] sm:$0xff]
        %v181 = vld [vmem:[%s117 + $0x158] sm:$0xff]
        %v182 = vld [vmem:[%s117 + $0x160] sm:$0xff]
        %v183 = vld [vmem:[%s117 + $0x168] sm:$0xff]
        %v184 = vld [vmem:[%s117 + $0x170] sm:$0xff]
        %v185 = vld [vmem:[%s117 + $0x178] sm:$0xff]
        %v186 = vld [vmem:[%s117 + $0x180] sm:$0xff]
        %v187 = vld [vmem:[%s117 + $0x188] sm:$0xff]
        %v188 = vld [vmem:[%s117 + $0x190] sm:$0xff]
        %v189 = vld [vmem:[%s117 + $0x198] sm:$0xff]
        %v190 = vld [vmem:[%s117 + $0x1a0] sm:$0xff]
        %v191 = vld [vmem:[%s117 + $0x1a8] sm:$0xff]
        %v192 = vld [vmem:[%s117 + $0x1b0] sm:$0xff]
        %v193 = vld [vmem:[%s117 + $0x1b8] sm:$0xff]
        %v194 = vld [vmem:[%s117 + $0x1c0] sm:$0xff]
        %v195 = vld [vmem:[%s117 + $0x1c8] sm:$0xff]
        %v196 = vld [vmem:[%s117 + $0x1d0] sm:$0xff]
        %v197 = vld [vmem:[%s117 + $0x1d8] sm:$0xff]
        %v198 = vld [vmem:[%s117 + $0x1e0] sm:$0xff]
        %v199 = vld [vmem:[%s117 + $0x1e8] sm:$0xff]
        %v200 = vld [vmem:[%s117 + $0x1f0] sm:$0xff]
        %v201 = vld [vmem:[%s117 + $0x1f8] sm:$0xff]
        %v202 = vld [vmem:[%s117 + $0x200] sm:$0xff]
        %v203 = vld [vmem:[%s117 + $0x208] sm:$0xff]
        %v204 = vld [vmem:[%s117 + $0x210] sm:$0xff]
        %v205 = vld [vmem:[%s117 + $0x218] sm:$0xff]
        %v206 = vld [vmem:[%s117 + $0x220] sm:$0xff]
        %v207 = vld [vmem:[%s117 + $0x228] sm:$0xff]
        %v208 = vld [vmem:[%s117 + $0x230] sm:$0xff]
        %v209 = vld [vmem:[%s117 + $0x238] sm:$0xff]
        %v210 = vld [vmem:[%s117 + $0x240] sm:$0xff]
        %v211 = vld [vmem:[%s117 + $0x248] sm:$0xff]
        %v212 = vld [vmem:[%s117 + $0x250] sm:$0xff]
        %v213 = vld [vmem:[%s117 + $0x258] sm:$0xff]
        %v214 = vld [vmem:[%s117 + $0x260] sm:$0xff]
        %v215 = vld [vmem:[%s117 + $0x268] sm:$0xff]
        %v216 = vld [vmem:[%s117 + $0x270] sm:$0xff]
        %v217 = vld [vmem:[%s117 + $0x278] sm:$0xff]
        %v218 = vld [vmem:[%s117 + $0x280] sm:$0xff]
        %v219 = vld [vmem:[%s117 + $0x288] sm:$0xff]
        %v220 = vld [vmem:[%s117 + $0x290] sm:$0xff]
        %v221 = vld [vmem:[%s117 + $0x298] sm:$0xff]
        %v222 = vld [vmem:[%s117 + $0x2a0] sm:$0xff]
        %v223 = vld [vmem:[%s117 + $0x2a8] sm:$0xff]
        %v224 = vld [vmem:[%s117 + $0x2b0] sm:$0xff]
        %v225 = vld [vmem:[%s117 + $0x2b8] sm:$0xff]
        %v226 = vld [vmem:[%s117 + $0x2c0] sm:$0xff]
        %v227 = vld [vmem:[%s117 + $0x2c8] sm:$0xff]
        %v228 = vld [vmem:[%s117 + $0x2d0] sm:$0xff]
        %v229 = vld [vmem:[%s117 + $0x2d8] sm:$0xff]
        %v230 = vld [vmem:[%s117 + $0x2e0] sm:$0xff]
        %v231 = vld [vmem:[%s117 + $0x2e8] sm:$0xff]
        %v232 = vld [vmem:[%s117 + $0x2f0] sm:$0xff]
        %v233 = vld [vmem:[%s117 + $0x2f8] sm:$0xff]
        %v234 = vld [vmem:[%s117 + $0x300] sm:$0xff]
        %v235 = vld [vmem:[%s117 + $0x308] sm:$0xff]
        %v236 = vld [vmem:[%s117 + $0x310] sm:$0xff]
        %v237 = vld [vmem:[%s117 + $0x318] sm:$0xff]
        %v238 = vld [vmem:[%s117 + $0x320] sm:$0xff]
        %v239 = vld [vmem:[%s117 + $0x328] sm:$0xff]
        %v240 = vld [vmem:[%s117 + $0x330] sm:$0xff]
        %v241 = vld [vmem:[%s117 + $0x338] sm:$0xff]
        %v242 = vld [vmem:[%s117 + $0x340] sm:$0xff]
        %v243 = vld [vmem:[%s117 + $0x348] sm:$0xff]
        %v244 = vld [vmem:[%s117 + $0x350] sm:$0xff]
        %v245 = vld [vmem:[%s117 + $0x358] sm:$0xff]
        %v246 = vld [vmem:[%s117 + $0x360] sm:$0xff]
        %v247 = vld [vmem:[%s117 + $0x368] sm:$0xff]
        %v248 = vld [vmem:[%s117 + $0x370] sm:$0xff]
        %v249 = vld [vmem:[%s117 + $0x378] sm:$0xff]
        %v250 = vld [vmem:[%s117 + $0x380] sm:$0xff]
        %v251 = vld [vmem:[%s117 + $0x388] sm:$0xff]
        %v252 = vld [vmem:[%s117 + $0x390] sm:$0xff]
        %v253 = vld [vmem:[%s117 + $0x398] sm:$0xff]
        %v254 = vld [vmem:[%s117 + $0x3a0] sm:$0xff]
        %v255 = vld [vmem:[%s117 + $0x3a8] sm:$0xff]
        %v256 = vld [vmem:[%s117 + $0x3b0] sm:$0xff]
        %v257 = vld [vmem:[%s117 + $0x3b8] sm:$0xff]
        %v258 = vld [vmem:[%s117 + $0x3c0] sm:$0xff]
        %v259 = vld [vmem:[%s117 + $0x3c8] sm:$0xff]
        %v260 = vld [vmem:[%s117 + $0x3d0] sm:$0xff]
        %v261 = vld [vmem:[%s117 + $0x3d8] sm:$0xff]
        %v262 = vld [vmem:[%s117 + $0x3e0] sm:$0xff]
        %v263 = vld [vmem:[%s117 + $0x3e8] sm:$0xff]
        %v264 = vld [vmem:[%s117 + $0x3f0] sm:$0xff]
        %v265 = vld [vmem:[%s117 + $0x3f8] sm:$0xff]
        %v266 = vld [vmem:[%s117 + $0x400] sm:$0xff]
        %v267 = vld [vmem:[%s117 + $0x408] sm:$0xff]
        %v268 = vld [vmem:[%s117 + $0x410] sm:$0xff]
        %v269 = vld [vmem:[%s117 + $0x418] sm:$0xff]
        %v270 = vld [vmem:[%s117 + $0x420] sm:$0xff]
        %v271 = vld [vmem:[%s117 + $0x428] sm:$0xff]
        %v272 = vld [vmem:[%s117 + $0x430] sm:$0xff]
        %v273 = vld [vmem:[%s117 + $0x438] sm:$0xff]
        %v274 = vld [vmem:[%s117 + $0x440] sm:$0xff]
        %v275 = vld [vmem:[%s117 + $0x448] sm:$0xff]
        %v276 = vld [vmem:[%s117 + $0x450] sm:$0xff]
        %v277 = vld [vmem:[%s117 + $0x458] sm:$0xff]
        %v278 = vld [vmem:[%s117 + $0x460] sm:$0xff]
        %v279 = vld [vmem:[%s117 + $0x468] sm:$0xff]
        %v280 = vld [vmem:[%s117 + $0x470] sm:$0xff]
        %v281 = vld [vmem:[%s117 + $0x478] sm:$0xff]
        %v282 = vld [vmem:[%s117 + $0x480] sm:$0xff]
        %v283 = vld [vmem:[%s117 + $0x488] sm:$0xff]
        %v284 = vld [vmem:[%s117 + $0x490] sm:$0xff]
        %v285 = vld [vmem:[%s117 + $0x498] sm:$0xff]
        %v286 = vld [vmem:[%s117 + $0x4a0] sm:$0xff]
        %v287 = vld [vmem:[%s117 + $0x4a8] sm:$0xff]
        %v288 = vld [vmem:[%s117 + $0x4b0] sm:$0xff]
        %v289 = vld [vmem:[%s117 + $0x4b8] sm:$0xff]
        %v290 = vld [vmem:[%s117 + $0x4c0] sm:$0xff]
        %v291 = vld [vmem:[%s117 + $0x4c8] sm:$0xff]
        %v292 = vld [vmem:[%s117 + $0x4d0] sm:$0xff]
        %v293 = vld [vmem:[%s117 + $0x4d8] sm:$0xff]
        %v294 = vld [vmem:[%s117 + $0x4e0] sm:$0xff]
        %v295 = vld [vmem:[%s117 + $0x4e8] sm:$0xff]
        %v296 = vld [vmem:[%s117 + $0x4f0] sm:$0xff]
        %v297 = vld [vmem:[%s117 + $0x4f8] sm:$0xff]
        %v298 = vld [vmem:[%s117 + $0x500] sm:$0xff]
        %v299 = vld [vmem:[%s117 + $0x508] sm:$0xff]
        %v300 = vld [vmem:[%s117 + $0x510] sm:$0xff]
        %v301 = vld [vmem:[%s117 + $0x518] sm:$0xff]
        %v302 = vld [vmem:[%s117 + $0x520] sm:$0xff]
        %v303 = vld [vmem:[%s117 + $0x528] sm:$0xff]
        %v304 = vld [vmem:[%s117 + $0x530] sm:$0xff]
        %v305 = vld [vmem:[%s117 + $0x538] sm:$0xff]
        %v306 = vld [vmem:[%s117 + $0x540] sm:$0xff]
        %v307 = vld [vmem:[%s117 + $0x548] sm:$0xff]
        %v308 = vld [vmem:[%s117 + $0x550] sm:$0xff]
        %v309 = vld [vmem:[%s117 + $0x558] sm:$0xff]
        %v310 = vld [vmem:[%s117 + $0x560] sm:$0xff]
        %v311 = vld [vmem:[%s117 + $0x568] sm:$0xff]
        %v312 = vld [vmem:[%s117 + $0x570] sm:$0xff]
        %v313 = vld [vmem:[%s117 + $0x578] sm:$0xff]
        %v314 = vld [vmem:[%s117 + $0x580] sm:$0xff]
        %v315 = vld [vmem:[%s117 + $0x588] sm:$0xff]
        %v316 = vld [vmem:[%s117 + $0x590] sm:$0xff]
        %v317 = vld [vmem:[%s117 + $0x598] sm:$0xff]
        %v318 = vld [vmem:[%s117 + $0x5a0] sm:$0xff]
        %v319 = vld [vmem:[%s117 + $0x5a8] sm:$0xff]
        %v320 = vld [vmem:[%s117 + $0x5b0] sm:$0xff]
        %v321 = vld [vmem:[%s117 + $0x5b8] sm:$0xff]
        %v322 = vld [vmem:[%s117 + $0x5c0] sm:$0xff]
        %v323 = vld [vmem:[%s117 + $0x5c8] sm:$0xff]
        %v324 = vld [vmem:[%s117 + $0x5d0] sm:$0xff]
        %v325 = vld [vmem:[%s117 + $0x5d8] sm:$0xff]
        %v326 = vld [vmem:[%s117 + $0x5e0] sm:$0xff]
        %v327 = vld [vmem:[%s117 + $0x5e8] sm:$0xff]
        %v328 = vld [vmem:[%s117 + $0x5f0] sm:$0xff]
        %v329 = vld [vmem:[%s117 + $0x5f8] sm:$0xff]
        %v330 = vld [vmem:[%s117 + $0x600] sm:$0xff]
        %v331 = vld [vmem:[%s117 + $0x608] sm:$0xff]
        %v332 = vld [vmem:[%s117 + $0x610] sm:$0xff]
        %v333 = vld [vmem:[%s117 + $0x618] sm:$0xff]
        %v334 = vld [vmem:[%s117 + $0x620] sm:$0xff]
        %v335 = vld [vmem:[%s117 + $0x628] sm:$0xff]
        %v336 = vld [vmem:[%s117 + $0x630] sm:$0xff]
        %v337 = vld [vmem:[%s117 + $0x638] sm:$0xff]
        %v338 = vld [vmem:[%s117 + $0x640] sm:$0xff]
        %v339 = vld [vmem:[%s117 + $0x648] sm:$0xff]
        %v340 = vld [vmem:[%s117 + $0x650] sm:$0xff]
        %v341 = vld [vmem:[%s117 + $0x658] sm:$0xff]
        %v342 = vld [vmem:[%s117 + $0x660] sm:$0xff]
        %v343 = vld [vmem:[%s117 + $0x668] sm:$0xff]
        %v344 = vld [vmem:[%s117 + $0x670] sm:$0xff]
        %v345 = vld [vmem:[%s117 + $0x678] sm:$0xff]
        %v346 = vld [vmem:[%s117 + $0x680] sm:$0xff]
        %v347 = vld [vmem:[%s117 + $0x688] sm:$0xff]
        %v348 = vld [vmem:[%s117 + $0x690] sm:$0xff]
        %v349 = vld [vmem:[%s117 + $0x698] sm:$0xff]
        %v350 = vld [vmem:[%s117 + $0x6a0] sm:$0xff]
        %v351 = vld [vmem:[%s117 + $0x6a8] sm:$0xff]
        %v352 = vld [vmem:[%s117 + $0x6b0] sm:$0xff]
        %v353 = vld [vmem:[%s117 + $0x6b8] sm:$0xff]
        %v354 = vld [vmem:[%s117 + $0x6c0] sm:$0xff]
        %v355 = vld [vmem:[%s117 + $0x6c8] sm:$0xff]
        %v356 = vld [vmem:[%s117 + $0x6d0] sm:$0xff]
        %v357 = vld [vmem:[%s117 + $0x6d8] sm:$0xff]
        %v358 = vld [vmem:[%s117 + $0x6e0] sm:$0xff]
        %v359 = vld [vmem:[%s117 + $0x6e8] sm:$0xff]
        %v360 = vld [vmem:[%s117 + $0x6f0] sm:$0xff]
        %v361 = vld [vmem:[%s117 + $0x6f8] sm:$0xff]
        %v362 = vld [vmem:[%s117 + $0x700] sm:$0xff]
        %v363 = vld [vmem:[%s117 + $0x708] sm:$0xff]
        %v364 = vld [vmem:[%s117 + $0x710] sm:$0xff]
        %v365 = vld [vmem:[%s117 + $0x718] sm:$0xff]
        %v366 = vld [vmem:[%s117 + $0x720] sm:$0xff]
        %v367 = vld [vmem:[%s117 + $0x728] sm:$0xff]
        %v368 = vld [vmem:[%s117 + $0x730] sm:$0xff]
        %v369 = vld [vmem:[%s117 + $0x738] sm:$0xff]
        %v370 = vld [vmem:[%s117 + $0x740] sm:$0xff]
        %v371 = vld [vmem:[%s117 + $0x748] sm:$0xff]
        %v372 = vld [vmem:[%s117 + $0x750] sm:$0xff]
        %v373 = vld [vmem:[%s117 + $0x758] sm:$0xff]
        %v374 = vld [vmem:[%s117 + $0x760] sm:$0xff]
        %v375 = vld [vmem:[%s117 + $0x768] sm:$0xff]
        %v376 = vld [vmem:[%s117 + $0x770] sm:$0xff]
        %v377 = vld [vmem:[%s117 + $0x778] sm:$0xff]
        %v378 = vld [vmem:[%s117 + $0x780] sm:$0xff]
        %v379 = vld [vmem:[%s117 + $0x788] sm:$0xff]
        %v380 = vld [vmem:[%s117 + $0x790] sm:$0xff]
        %v381 = vld [vmem:[%s117 + $0x798] sm:$0xff]
        %v382 = vld [vmem:[%s117 + $0x7a0] sm:$0xff]
        %v383 = vld [vmem:[%s117 + $0x7a8] sm:$0xff]
        %v384 = vld [vmem:[%s117 + $0x7b0] sm:$0xff]
        %v385 = vld [vmem:[%s117 + $0x7b8] sm:$0xff]
        %v386 = vld [vmem:[%s117 + $0x7c0] sm:$0xff]
        %v387 = vld [vmem:[%s117 + $0x7c8] sm:$0xff]
        %v388 = vld [vmem:[%s117 + $0x7d0] sm:$0xff]
        %v389 = vld [vmem:[%s117 + $0x7d8] sm:$0xff]
        %v390 = vld [vmem:[%s117 + $0x7e0] sm:$0xff]
        %v391 = vld [vmem:[%s117 + $0x7e8] sm:$0xff]
        %v392 = vld [vmem:[%s117 + $0x7f0] sm:$0xff]
        %v393 = vld [vmem:[%s117 + $0x7f8] sm:$0xff]
        %v394 = vld [vmem:[%s117 + $0x800] sm:$0xff]
        %v395 = vld [vmem:[%s117 + $0x808] sm:$0xff]
        %v396 = vld [vmem:[%s117 + $0x810] sm:$0xff]
        %v397 = vld [vmem:[%s117 + $0x818] sm:$0xff]
        %v398 = vld [vmem:[%s117 + $0x820] sm:$0xff]
        %v399 = vld [vmem:[%s117 + $0x828] sm:$0xff]
        %v400 = vld [vmem:[%s117 + $0x830] sm:$0xff]
        %v401 = vld [vmem:[%s117 + $0x838] sm:$0xff]
        %v402 = vld [vmem:[%s117 + $0x840] sm:$0xff]
        %v403 = vld [vmem:[%s117 + $0x848] sm:$0xff]
        %v404 = vld [vmem:[%s117 + $0x850] sm:$0xff]
        %v405 = vld [vmem:[%s117 + $0x858] sm:$0xff]
        %v406 = vld [vmem:[%s117 + $0x860] sm:$0xff]
        %v407 = vld [vmem:[%s117 + $0x868] sm:$0xff]
        %v408 = vld [vmem:[%s117 + $0x870] sm:$0xff]
        %v409 = vld [vmem:[%s117 + $0x878] sm:$0xff]
        %v410 = vld [vmem:[%s117 + $0x880] sm:$0xff]
        %v411 = vld [vmem:[%s117 + $0x888] sm:$0xff]
        %v412 = vld [vmem:[%s117 + $0x890] sm:$0xff]
        %v413 = vld [vmem:[%s117 + $0x898] sm:$0xff]
        %v414 = vld [vmem:[%s117 + $0x8a0] sm:$0xff]
        %v415 = vld [vmem:[%s117 + $0x8a8] sm:$0xff]
        %v416 = vld [vmem:[%s117 + $0x8b0] sm:$0xff]
        %v417 = vld [vmem:[%s117 + $0x8b8] sm:$0xff]
        %v418 = vld [vmem:[%s117 + $0x8c0] sm:$0xff]
        %v419 = vld [vmem:[%s117 + $0x8c8] sm:$0xff]
        %v420 = vld [vmem:[%s117 + $0x8d0] sm:$0xff]
        %v421 = vld [vmem:[%s117 + $0x8d8] sm:$0xff]
        %v422 = vld [vmem:[%s117 + $0x8e0] sm:$0xff]
        %v423 = vld [vmem:[%s117 + $0x8e8] sm:$0xff]
        %v424 = vld [vmem:[%s117 + $0x8f0] sm:$0xff]
        %v425 = vld [vmem:[%s117 + $0x8f8] sm:$0xff]
        %v426 = vmax.f32 %v138, %v139
        %v427 = vmax.f32 %v426, %v140
        %428 = vmax.xlane.f32.xlu0 %v427
        %v429 = vpop.xlane.xlu0 %428
        %v430 = vmax.f32 %v141, %v142
        %v431 = vmax.f32 %v430, %v143
        %432 = vmax.xlane.f32.xlu0 %v431
        %v433 = vpop.xlane.xlu0 %432
        %v434 = vmax.f32 %v144, %v145
        %v435 = vmax.f32 %v434, %v146
        %436 = vmax.xlane.f32.xlu0 %v435
        %v437 = vpop.xlane.xlu0 %436
        %v438 = vmax.f32 %v147, %v148
        %v439 = vmax.f32 %v438, %v149
        %440 = vmax.xlane.f32.xlu0 %v439
        %v441 = vpop.xlane.xlu0 %440
        %v442 = vmax.f32 %v150, %v151
        %v443 = vmax.f32 %v442, %v152
        %444 = vmax.xlane.f32.xlu0 %v443
        %v445 = vpop.xlane.xlu0 %444
        %v446 = vmax.f32 %v153, %v154
        %v447 = vmax.f32 %v446, %v155
        %448 = vmax.xlane.f32.xlu0 %v447
        %v449 = vpop.xlane.xlu0 %448
        %v450 = vmax.f32 %v156, %v157
        %v451 = vmax.f32 %v450, %v158
        %452 = vmax.xlane.f32.xlu0 %v451
        %v453 = vpop.xlane.xlu0 %452
        %v454 = vmax.f32 %v159, %v160
        %v455 = vmax.f32 %v454, %v161
        %456 = vmax.xlane.f32.xlu0 %v455
        %v457 = vpop.xlane.xlu0 %456
        %v458 = vmax.f32 %v162, %v163
        %v459 = vmax.f32 %v458, %v164
        %460 = vmax.xlane.f32.xlu0 %v459
        %v461 = vpop.xlane.xlu0 %460
        %v462 = vmax.f32 %v165, %v166
        %v463 = vmax.f32 %v462, %v167
        %464 = vmax.xlane.f32.xlu0 %v463
        %v465 = vpop.xlane.xlu0 %464
        %v466 = vmax.f32 %v168, %v169
        %v467 = vmax.f32 %v466, %v170
        %468 = vmax.xlane.f32.xlu0 %v467
        %v469 = vpop.xlane.xlu0 %468
        %v470 = vmax.f32 %v171, %v172
        %v471 = vmax.f32 %v470, %v173
        %472 = vmax.xlane.f32.xlu0 %v471
        %v473 = vpop.xlane.xlu0 %472
        %v474 = vmax.f32 %v174, %v175
        %v475 = vmax.f32 %v474, %v176
        %476 = vmax.xlane.f32.xlu0 %v475
        %v477 = vpop.xlane.xlu0 %476
        %v478 = vmax.f32 %v177, %v178
        %v479 = vmax.f32 %v478, %v179
        %480 = vmax.xlane.f32.xlu0 %v479
        %v481 = vpop.xlane.xlu0 %480
        %v482 = vmax.f32 %v180, %v181
        %v483 = vmax.f32 %v482, %v182
        %484 = vmax.xlane.f32.xlu0 %v483
        %v485 = vpop.xlane.xlu0 %484
        %v486 = vmax.f32 %v183, %v184
        %v487 = vmax.f32 %v486, %v185
        %488 = vmax.xlane.f32.xlu0 %v487
        %v489 = vpop.xlane.xlu0 %488
        %v490 = vmax.f32 %v186, %v187
        %v491 = vmax.f32 %v490, %v188
        %492 = vmax.xlane.f32.xlu0 %v491
        %v493 = vpop.xlane.xlu0 %492
        %v494 = vmax.f32 %v189, %v190
        %v495 = vmax.f32 %v494, %v191
        %496 = vmax.xlane.f32.xlu0 %v495
        %v497 = vpop.xlane.xlu0 %496
        %v498 = vmax.f32 %v192, %v193
        %v499 = vmax.f32 %v498, %v194
        %500 = vmax.xlane.f32.xlu0 %v499
        %v501 = vpop.xlane.xlu0 %500
        %v502 = vmax.f32 %v195, %v196
        %v503 = vmax.f32 %v502, %v197
        %504 = vmax.xlane.f32.xlu0 %v503
        %v505 = vpop.xlane.xlu0 %504
        %v506 = vmax.f32 %v198, %v199
        %v507 = vmax.f32 %v506, %v200
        %508 = vmax.xlane.f32.xlu0 %v507
        %v509 = vpop.xlane.xlu0 %508
        %v510 = vmax.f32 %v201, %v202
        %v511 = vmax.f32 %v510, %v203
        %512 = vmax.xlane.f32.xlu0 %v511
        %v513 = vpop.xlane.xlu0 %512
        %v514 = vmax.f32 %v204, %v205
        %v515 = vmax.f32 %v514, %v206
        %516 = vmax.xlane.f32.xlu0 %v515
        %v517 = vpop.xlane.xlu0 %516
        %v518 = vmax.f32 %v207, %v208
        %v519 = vmax.f32 %v518, %v209
        %520 = vmax.xlane.f32.xlu0 %v519
        %v521 = vpop.xlane.xlu0 %520
        %v522 = vmax.f32 %v210, %v211
        %v523 = vmax.f32 %v522, %v212
        %524 = vmax.xlane.f32.xlu0 %v523
        %v525 = vpop.xlane.xlu0 %524
        %v526 = vmax.f32 %v213, %v214
        %v527 = vmax.f32 %v526, %v215
        %528 = vmax.xlane.f32.xlu0 %v527
        %v529 = vpop.xlane.xlu0 %528
        %v530 = vmax.f32 %v216, %v217
        %v531 = vmax.f32 %v530, %v218
        %532 = vmax.xlane.f32.xlu0 %v531
        %v533 = vpop.xlane.xlu0 %532
        %v534 = vmax.f32 %v219, %v220
        %v535 = vmax.f32 %v534, %v221
        %536 = vmax.xlane.f32.xlu0 %v535
        %v537 = vpop.xlane.xlu0 %536
        %v538 = vmax.f32 %v222, %v223
        %v539 = vmax.f32 %v538, %v224
        %540 = vmax.xlane.f32.xlu0 %v539
        %v541 = vpop.xlane.xlu0 %540
        %v542 = vmax.f32 %v225, %v226
        %v543 = vmax.f32 %v542, %v227
        %544 = vmax.xlane.f32.xlu0 %v543
        %v545 = vpop.xlane.xlu0 %544
        %v546 = vmax.f32 %v228, %v229
        %v547 = vmax.f32 %v546, %v230
        %548 = vmax.xlane.f32.xlu0 %v547
        %v549 = vpop.xlane.xlu0 %548
        %v550 = vmax.f32 %v231, %v232
        %v551 = vmax.f32 %v550, %v233
        %552 = vmax.xlane.f32.xlu0 %v551
        %v553 = vpop.xlane.xlu0 %552
        %v554 = vmax.f32 %v234, %v235
        %v555 = vmax.f32 %v554, %v236
        %556 = vmax.xlane.f32.xlu0 %v555
        %v557 = vpop.xlane.xlu0 %556
        %v558 = vmax.f32 %v237, %v238
        %v559 = vmax.f32 %v558, %v239
        %560 = vmax.xlane.f32.xlu0 %v559
        %v561 = vpop.xlane.xlu0 %560
        %v562 = vmax.f32 %v240, %v241
        %v563 = vmax.f32 %v562, %v242
        %564 = vmax.xlane.f32.xlu0 %v563
        %v565 = vpop.xlane.xlu0 %564
        %v566 = vmax.f32 %v243, %v244
        %v567 = vmax.f32 %v566, %v245
        %568 = vmax.xlane.f32.xlu0 %v567
        %v569 = vpop.xlane.xlu0 %568
        %v570 = vmax.f32 %v246, %v247
        %v571 = vmax.f32 %v570, %v248
        %572 = vmax.xlane.f32.xlu0 %v571
        %v573 = vpop.xlane.xlu0 %572
        %v574 = vmax.f32 %v249, %v250
        %v575 = vmax.f32 %v574, %v251
        %576 = vmax.xlane.f32.xlu0 %v575
        %v577 = vpop.xlane.xlu0 %576
        %v578 = vmax.f32 %v252, %v253
        %v579 = vmax.f32 %v578, %v254
        %580 = vmax.xlane.f32.xlu0 %v579
        %v581 = vpop.xlane.xlu0 %580
        %v582 = vmax.f32 %v255, %v256
        %v583 = vmax.f32 %v582, %v257
        %584 = vmax.xlane.f32.xlu0 %v583
        %v585 = vpop.xlane.xlu0 %584
        %v586 = vmax.f32 %v258, %v259
        %v587 = vmax.f32 %v586, %v260
        %588 = vmax.xlane.f32.xlu0 %v587
        %v589 = vpop.xlane.xlu0 %588
        %v590 = vmax.f32 %v261, %v262
        %v591 = vmax.f32 %v590, %v263
        %592 = vmax.xlane.f32.xlu0 %v591
        %v593 = vpop.xlane.xlu0 %592
        %v594 = vmax.f32 %v264, %v265
        %v595 = vmax.f32 %v594, %v266
        %596 = vmax.xlane.f32.xlu0 %v595
        %v597 = vpop.xlane.xlu0 %596
        %v598 = vmax.f32 %v267, %v268
        %v599 = vmax.f32 %v598, %v269
        %600 = vmax.xlane.f32.xlu0 %v599
        %v601 = vpop.xlane.xlu0 %600
        %v602 = vmax.f32 %v270, %v271
        %v603 = vmax.f32 %v602, %v272
        %604 = vmax.xlane.f32.xlu0 %v603
        %v605 = vpop.xlane.xlu0 %604
        %v606 = vmax.f32 %v273, %v274
        %v607 = vmax.f32 %v606, %v275
        %608 = vmax.xlane.f32.xlu0 %v607
        %v609 = vpop.xlane.xlu0 %608
        %v610 = vmax.f32 %v276, %v277
        %v611 = vmax.f32 %v610, %v278
        %612 = vmax.xlane.f32.xlu0 %v611
        %v613 = vpop.xlane.xlu0 %612
        %v614 = vmax.f32 %v279, %v280
        %v615 = vmax.f32 %v614, %v281
        %616 = vmax.xlane.f32.xlu0 %v615
        %v617 = vpop.xlane.xlu0 %616
        %v618 = vmax.f32 %v282, %v283
        %v619 = vmax.f32 %v618, %v284
        %620 = vmax.xlane.f32.xlu0 %v619
        %v621 = vpop.xlane.xlu0 %620
        %v622 = vmax.f32 %v285, %v286
        %v623 = vmax.f32 %v622, %v287
        %624 = vmax.xlane.f32.xlu0 %v623
        %v625 = vpop.xlane.xlu0 %624
        %v626 = vmax.f32 %v288, %v289
        %v627 = vmax.f32 %v626, %v290
        %628 = vmax.xlane.f32.xlu0 %v627
        %v629 = vpop.xlane.xlu0 %628
        %v630 = vmax.f32 %v291, %v292
        %v631 = vmax.f32 %v630, %v293
        %632 = vmax.xlane.f32.xlu0 %v631
        %v633 = vpop.xlane.xlu0 %632
        %v634 = vmax.f32 %v294, %v295
        %v635 = vmax.f32 %v634, %v296
        %636 = vmax.xlane.f32.xlu0 %v635
        %v637 = vpop.xlane.xlu0 %636
        %v638 = vmax.f32 %v297, %v298
        %v639 = vmax.f32 %v638, %v299
        %640 = vmax.xlane.f32.xlu0 %v639
        %v641 = vpop.xlane.xlu0 %640
        %v642 = vmax.f32 %v300, %v301
        %v643 = vmax.f32 %v642, %v302
        %644 = vmax.xlane.f32.xlu0 %v643
        %v645 = vpop.xlane.xlu0 %644
        %v646 = vmax.f32 %v303, %v304
        %v647 = vmax.f32 %v646, %v305
        %648 = vmax.xlane.f32.xlu0 %v647
        %v649 = vpop.xlane.xlu0 %648
        %v650 = vmax.f32 %v306, %v307
        %v651 = vmax.f32 %v650, %v308
        %652 = vmax.xlane.f32.xlu0 %v651
        %v653 = vpop.xlane.xlu0 %652
        %v654 = vmax.f32 %v309, %v310
        %v655 = vmax.f32 %v654, %v311
        %656 = vmax.xlane.f32.xlu0 %v655
        %v657 = vpop.xlane.xlu0 %656
        %v658 = vmax.f32 %v312, %v313
        %v659 = vmax.f32 %v658, %v314
        %660 = vmax.xlane.f32.xlu0 %v659
        %v661 = vpop.xlane.xlu0 %660
        %v662 = vmax.f32 %v315, %v316
        %v663 = vmax.f32 %v662, %v317
        %664 = vmax.xlane.f32.xlu0 %v663
        %v665 = vpop.xlane.xlu0 %664
        %v666 = vmax.f32 %v318, %v319
        %v667 = vmax.f32 %v666, %v320
        %668 = vmax.xlane.f32.xlu0 %v667
        %v669 = vpop.xlane.xlu0 %668
        %v670 = vmax.f32 %v321, %v322
        %v671 = vmax.f32 %v670, %v323
        %672 = vmax.xlane.f32.xlu0 %v671
        %v673 = vpop.xlane.xlu0 %672
        %v674 = vmax.f32 %v324, %v325
        %v675 = vmax.f32 %v674, %v326
        %676 = vmax.xlane.f32.xlu0 %v675
        %v677 = vpop.xlane.xlu0 %676
        %v678 = vmax.f32 %v327, %v328
        %v679 = vmax.f32 %v678, %v329
        %680 = vmax.xlane.f32.xlu0 %v679
        %v681 = vpop.xlane.xlu0 %680
        %v682 = vmax.f32 %v330, %v331
        %v683 = vmax.f32 %v682, %v332
        %684 = vmax.xlane.f32.xlu0 %v683
        %v685 = vpop.xlane.xlu0 %684
        %v686 = vmax.f32 %v333, %v334
        %v687 = vmax.f32 %v686, %v335
        %688 = vmax.xlane.f32.xlu0 %v687
        %v689 = vpop.xlane.xlu0 %688
        %v690 = vmax.f32 %v336, %v337
        %v691 = vmax.f32 %v690, %v338
        %692 = vmax.xlane.f32.xlu0 %v691
        %v693 = vpop.xlane.xlu0 %692
        %v694 = vmax.f32 %v339, %v340
        %v695 = vmax.f32 %v694, %v341
        %696 = vmax.xlane.f32.xlu0 %v695
        %v697 = vpop.xlane.xlu0 %696
        %v698 = vmax.f32 %v342, %v343
        %v699 = vmax.f32 %v698, %v344
        %700 = vmax.xlane.f32.xlu0 %v699
        %v701 = vpop.xlane.xlu0 %700
        %v702 = vmax.f32 %v345, %v346
        %v703 = vmax.f32 %v702, %v347
        %704 = vmax.xlane.f32.xlu0 %v703
        %v705 = vpop.xlane.xlu0 %704
        %v706 = vmax.f32 %v348, %v349
        %v707 = vmax.f32 %v706, %v350
        %708 = vmax.xlane.f32.xlu0 %v707
        %v709 = vpop.xlane.xlu0 %708
        %v710 = vmax.f32 %v351, %v352
        %v711 = vmax.f32 %v710, %v353
        %712 = vmax.xlane.f32.xlu0 %v711
        %v713 = vpop.xlane.xlu0 %712
        %v714 = vmax.f32 %v354, %v355
        %v715 = vmax.f32 %v714, %v356
        %716 = vmax.xlane.f32.xlu0 %v715
        %v717 = vpop.xlane.xlu0 %716
        %v718 = vmax.f32 %v357, %v358
        %v719 = vmax.f32 %v718, %v359
        %720 = vmax.xlane.f32.xlu0 %v719
        %v721 = vpop.xlane.xlu0 %720
        %v722 = vmax.f32 %v360, %v361
        %v723 = vmax.f32 %v722, %v362
        %724 = vmax.xlane.f32.xlu0 %v723
        %v725 = vpop.xlane.xlu0 %724
        %v726 = vmax.f32 %v363, %v364
        %v727 = vmax.f32 %v726, %v365
        %728 = vmax.xlane.f32.xlu0 %v727
        %v729 = vpop.xlane.xlu0 %728
        %v730 = vmax.f32 %v366, %v367
        %v731 = vmax.f32 %v730, %v368
        %732 = vmax.xlane.f32.xlu0 %v731
        %v733 = vpop.xlane.xlu0 %732
        %v734 = vmax.f32 %v369, %v370
        %v735 = vmax.f32 %v734, %v371
        %736 = vmax.xlane.f32.xlu0 %v735
        %v737 = vpop.xlane.xlu0 %736
        %v738 = vmax.f32 %v372, %v373
        %v739 = vmax.f32 %v738, %v374
        %740 = vmax.xlane.f32.xlu0 %v739
        %v741 = vpop.xlane.xlu0 %740
        %v742 = vmax.f32 %v375, %v376
        %v743 = vmax.f32 %v742, %v377
        %744 = vmax.xlane.f32.xlu0 %v743
        %v745 = vpop.xlane.xlu0 %744
        %v746 = vmax.f32 %v378, %v379
        %v747 = vmax.f32 %v746, %v380
        %748 = vmax.xlane.f32.xlu0 %v747
        %v749 = vpop.xlane.xlu0 %748
        %v750 = vmax.f32 %v381, %v382
        %v751 = vmax.f32 %v750, %v383
        %752 = vmax.xlane.f32.xlu0 %v751
        %v753 = vpop.xlane.xlu0 %752
        %v754 = vmax.f32 %v384, %v385
        %v755 = vmax.f32 %v754, %v386
        %756 = vmax.xlane.f32.xlu0 %v755
        %v757 = vpop.xlane.xlu0 %756
        %v758 = vmax.f32 %v387, %v388
        %v759 = vmax.f32 %v758, %v389
        %760 = vmax.xlane.f32.xlu0 %v759
        %v761 = vpop.xlane.xlu0 %760
        %v762 = vmax.f32 %v390, %v391
        %v763 = vmax.f32 %v762, %v392
        %764 = vmax.xlane.f32.xlu0 %v763
        %v765 = vpop.xlane.xlu0 %764
        %v766 = vmax.f32 %v393, %v394
        %v767 = vmax.f32 %v766, %v395
        %768 = vmax.xlane.f32.xlu0 %v767
        %v769 = vpop.xlane.xlu0 %768
        %v770 = vmax.f32 %v396, %v397
        %v771 = vmax.f32 %v770, %v398
        %772 = vmax.xlane.f32.xlu0 %v771
        %v773 = vpop.xlane.xlu0 %772
        %v774 = vmax.f32 %v399, %v400
        %v775 = vmax.f32 %v774, %v401
        %776 = vmax.xlane.f32.xlu0 %v775
        %v777 = vpop.xlane.xlu0 %776
        %v778 = vmax.f32 %v402, %v403
        %v779 = vmax.f32 %v778, %v404
        %780 = vmax.xlane.f32.xlu0 %v779
        %v781 = vpop.xlane.xlu0 %780
        %v782 = vmax.f32 %v405, %v406
        %v783 = vmax.f32 %v782, %v407
        %784 = vmax.xlane.f32.xlu0 %v783
        %v785 = vpop.xlane.xlu0 %784
        %v786 = vmax.f32 %v408, %v409
        %v787 = vmax.f32 %v786, %v410
        %788 = vmax.xlane.f32.xlu0 %v787
        %v789 = vpop.xlane.xlu0 %788
        %v790 = vmax.f32 %v411, %v412
        %v791 = vmax.f32 %v790, %v413
        %792 = vmax.xlane.f32.xlu0 %v791
        %v793 = vpop.xlane.xlu0 %792
        %v794 = vmax.f32 %v414, %v415
        %v795 = vmax.f32 %v794, %v416
        %796 = vmax.xlane.f32.xlu0 %v795
        %v797 = vpop.xlane.xlu0 %796
        %v798 = vmax.f32 %v417, %v418
        %v799 = vmax.f32 %v798, %v419
        %800 = vmax.xlane.f32.xlu0 %v799
        %v801 = vpop.xlane.xlu0 %800
        %v802 = vmax.f32 %v420, %v421
        %v803 = vmax.f32 %v802, %v422
        %804 = vmax.xlane.f32.xlu0 %v803
        %v805 = vpop.xlane.xlu0 %804
        %v806 = vmax.f32 %v423, %v424
        %v807 = vmax.f32 %v806, %v425
        %808 = vmax.xlane.f32.xlu0 %v807
        %v809 = vpop.xlane.xlu0 %808
        %v810 = vsub.f32 %v138, %v429
        %v811 = vsub.f32 %v139, %v429
        %v812 = vsub.f32 %v140, %v429
        %v813 = vsub.f32 %v141, %v433
        %v814 = vsub.f32 %v142, %v433
        %v815 = vsub.f32 %v143, %v433
        %v816 = vsub.f32 %v144, %v437
        %v817 = vsub.f32 %v145, %v437
        %v818 = vsub.f32 %v146, %v437
        %v819 = vsub.f32 %v147, %v441
        %v820 = vsub.f32 %v148, %v441
        %v821 = vsub.f32 %v149, %v441
        %v822 = vsub.f32 %v150, %v445
        %v823 = vsub.f32 %v151, %v445
        %v824 = vsub.f32 %v152, %v445
        %v825 = vsub.f32 %v153, %v449
        %v826 = vsub.f32 %v154, %v449
        %v827 = vsub.f32 %v155, %v449
        %v828 = vsub.f32 %v156, %v453
        %v829 = vsub.f32 %v157, %v453
        %v830 = vsub.f32 %v158, %v453
        %v831 = vsub.f32 %v159, %v457
        %v832 = vsub.f32 %v160, %v457
        %v833 = vsub.f32 %v161, %v457
        %v834 = vsub.f32 %v162, %v461
        %v835 = vsub.f32 %v163, %v461
        %v836 = vsub.f32 %v164, %v461
        %v837 = vsub.f32 %v165, %v465
        %v838 = vsub.f32 %v166, %v465
        %v839 = vsub.f32 %v167, %v465
        %v840 = vsub.f32 %v168, %v469
        %v841 = vsub.f32 %v169, %v469
        %v842 = vsub.f32 %v170, %v469
        %v843 = vsub.f32 %v171, %v473
        %v844 = vsub.f32 %v172, %v473
        %v845 = vsub.f32 %v173, %v473
        %v846 = vsub.f32 %v174, %v477
        %v847 = vsub.f32 %v175, %v477
        %v848 = vsub.f32 %v176, %v477
        %v849 = vsub.f32 %v177, %v481
        %v850 = vsub.f32 %v178, %v481
        %v851 = vsub.f32 %v179, %v481
        %v852 = vsub.f32 %v180, %v485
        %v853 = vsub.f32 %v181, %v485
        %v854 = vsub.f32 %v182, %v485
        %v855 = vsub.f32 %v183, %v489
        %v856 = vsub.f32 %v184, %v489
        %v857 = vsub.f32 %v185, %v489
        %v858 = vsub.f32 %v186, %v493
        %v859 = vsub.f32 %v187, %v493
        %v860 = vsub.f32 %v188, %v493
        %v861 = vsub.f32 %v189, %v497
        %v862 = vsub.f32 %v190, %v497
        %v863 = vsub.f32 %v191, %v497
        %v864 = vsub.f32 %v192, %v501
        %v865 = vsub.f32 %v193, %v501
        %v866 = vsub.f32 %v194, %v501
        %v867 = vsub.f32 %v195, %v505
        %v868 = vsub.f32 %v196, %v505
        %v869 = vsub.f32 %v197, %v505
        %v870 = vsub.f32 %v198, %v509
        %v871 = vsub.f32 %v199, %v509
        %v872 = vsub.f32 %v200, %v509
        %v873 = vsub.f32 %v201, %v513
        %v874 = vsub.f32 %v202, %v513
        %v875 = vsub.f32 %v203, %v513
        %v876 = vsub.f32 %v204, %v517
        %v877 = vsub.f32 %v205, %v517
        %v878 = vsub.f32 %v206, %v517
        %v879 = vsub.f32 %v207, %v521
        %v880 = vsub.f32 %v208, %v521
        %v881 = vsub.f32 %v209, %v521
        %v882 = vsub.f32 %v210, %v525
        %v883 = vsub.f32 %v211, %v525
        %v884 = vsub.f32 %v212, %v525
        %v885 = vsub.f32 %v213, %v529
        %v886 = vsub.f32 %v214, %v529
        %v887 = vsub.f32 %v215, %v529
        %v888 = vsub.f32 %v216, %v533
        %v889 = vsub.f32 %v217, %v533
        %v890 = vsub.f32 %v218, %v533
        %v891 = vsub.f32 %v219, %v537
        %v892 = vsub.f32 %v220, %v537
        %v893 = vsub.f32 %v221, %v537
        %v894 = vsub.f32 %v222, %v541
        %v895 = vsub.f32 %v223, %v541
        %v896 = vsub.f32 %v224, %v541
        %v897 = vsub.f32 %v225, %v545
        %v898 = vsub.f32 %v226, %v545
        %v899 = vsub.f32 %v227, %v545
        %v900 = vsub.f32 %v228, %v549
        %v901 = vsub.f32 %v229, %v549
        %v902 = vsub.f32 %v230, %v549
        %v903 = vsub.f32 %v231, %v553
        %v904 = vsub.f32 %v232, %v553
        %v905 = vsub.f32 %v233, %v553
        %v906 = vsub.f32 %v234, %v557
        %v907 = vsub.f32 %v235, %v557
        %v908 = vsub.f32 %v236, %v557
        %v909 = vsub.f32 %v237, %v561
        %v910 = vsub.f32 %v238, %v561
        %v911 = vsub.f32 %v239, %v561
        %v912 = vsub.f32 %v240, %v565
        %v913 = vsub.f32 %v241, %v565
        %v914 = vsub.f32 %v242, %v565
        %v915 = vsub.f32 %v243, %v569
        %v916 = vsub.f32 %v244, %v569
        %v917 = vsub.f32 %v245, %v569
        %v918 = vsub.f32 %v246, %v573
        %v919 = vsub.f32 %v247, %v573
        %v920 = vsub.f32 %v248, %v573
        %v921 = vsub.f32 %v249, %v577
        %v922 = vsub.f32 %v250, %v577
        %v923 = vsub.f32 %v251, %v577
        %v924 = vsub.f32 %v252, %v581
        %v925 = vsub.f32 %v253, %v581
        %v926 = vsub.f32 %v254, %v581
        %v927 = vsub.f32 %v255, %v585
        %v928 = vsub.f32 %v256, %v585
        %v929 = vsub.f32 %v257, %v585
        %v930 = vsub.f32 %v258, %v589
        %v931 = vsub.f32 %v259, %v589
        %v932 = vsub.f32 %v260, %v589
        %v933 = vsub.f32 %v261, %v593
        %v934 = vsub.f32 %v262, %v593
        %v935 = vsub.f32 %v263, %v593
        %v936 = vsub.f32 %v264, %v597
        %v937 = vsub.f32 %v265, %v597
        %v938 = vsub.f32 %v266, %v597
        %v939 = vsub.f32 %v267, %v601
        %v940 = vsub.f32 %v268, %v601
        %v941 = vsub.f32 %v269, %v601
        %v942 = vsub.f32 %v270, %v605
        %v943 = vsub.f32 %v271, %v605
        %v944 = vsub.f32 %v272, %v605
        %v945 = vsub.f32 %v273, %v609
        %v946 = vsub.f32 %v274, %v609
        %v947 = vsub.f32 %v275, %v609
        %v948 = vsub.f32 %v276, %v613
        %v949 = vsub.f32 %v277, %v613
        %v950 = vsub.f32 %v278, %v613
        %v951 = vsub.f32 %v279, %v617
        %v952 = vsub.f32 %v280, %v617
        %v953 = vsub.f32 %v281, %v617
        %v954 = vsub.f32 %v282, %v621
        %v955 = vsub.f32 %v283, %v621
        %v956 = vsub.f32 %v284, %v621
        %v957 = vsub.f32 %v285, %v625
        %v958 = vsub.f32 %v286, %v625
        %v959 = vsub.f32 %v287, %v625
        %v960 = vsub.f32 %v288, %v629
        %v961 = vsub.f32 %v289, %v629
        %v962 = vsub.f32 %v290, %v629
        %v963 = vsub.f32 %v291, %v633
        %v964 = vsub.f32 %v292, %v633
        %v965 = vsub.f32 %v293, %v633
        %v966 = vsub.f32 %v294, %v637
        %v967 = vsub.f32 %v295, %v637
        %v968 = vsub.f32 %v296, %v637
        %v969 = vsub.f32 %v297, %v641
        %v970 = vsub.f32 %v298, %v641
        %v971 = vsub.f32 %v299, %v641
        %v972 = vsub.f32 %v300, %v645
        %v973 = vsub.f32 %v301, %v645
        %v974 = vsub.f32 %v302, %v645
        %v975 = vsub.f32 %v303, %v649
        %v976 = vsub.f32 %v304, %v649
        %v977 = vsub.f32 %v305, %v649
        %v978 = vsub.f32 %v306, %v653
        %v979 = vsub.f32 %v307, %v653
        %v980 = vsub.f32 %v308, %v653
        %v981 = vsub.f32 %v309, %v657
        %v982 = vsub.f32 %v310, %v657
        %v983 = vsub.f32 %v311, %v657
        %v984 = vsub.f32 %v312, %v661
        %v985 = vsub.f32 %v313, %v661
        %v986 = vsub.f32 %v314, %v661
        %v987 = vsub.f32 %v315, %v665
        %v988 = vsub.f32 %v316, %v665
        %v989 = vsub.f32 %v317, %v665
        %v990 = vsub.f32 %v318, %v669
        %v991 = vsub.f32 %v319, %v669
        %v992 = vsub.f32 %v320, %v669
        %v993 = vsub.f32 %v321, %v673
        %v994 = vsub.f32 %v322, %v673
        %v995 = vsub.f32 %v323, %v673
        %v996 = vsub.f32 %v324, %v677
        %v997 = vsub.f32 %v325, %v677
        %v998 = vsub.f32 %v326, %v677
        %v999 = vsub.f32 %v327, %v681
        %v1000 = vsub.f32 %v328, %v681
        %v1001 = vsub.f32 %v329, %v681
        %v1002 = vsub.f32 %v330, %v685
        %v1003 = vsub.f32 %v331, %v685
        %v1004 = vsub.f32 %v332, %v685
        %v1005 = vsub.f32 %v333, %v689
        %v1006 = vsub.f32 %v334, %v689
        %v1007 = vsub.f32 %v335, %v689
        %v1008 = vsub.f32 %v336, %v693
        %v1009 = vsub.f32 %v337, %v693
        %v1010 = vsub.f32 %v338, %v693
        %v1011 = vsub.f32 %v339, %v697
        %v1012 = vsub.f32 %v340, %v697
        %v1013 = vsub.f32 %v341, %v697
        %v1014 = vsub.f32 %v342, %v701
        %v1015 = vsub.f32 %v343, %v701
        %v1016 = vsub.f32 %v344, %v701
        %v1017 = vsub.f32 %v345, %v705
        %v1018 = vsub.f32 %v346, %v705
        %v1019 = vsub.f32 %v347, %v705
        %v1020 = vsub.f32 %v348, %v709
        %v1021 = vsub.f32 %v349, %v709
        %v1022 = vsub.f32 %v350, %v709
        %v1023 = vsub.f32 %v351, %v713
        %v1024 = vsub.f32 %v352, %v713
        %v1025 = vsub.f32 %v353, %v713
        %v1026 = vsub.f32 %v354, %v717
        %v1027 = vsub.f32 %v355, %v717
        %v1028 = vsub.f32 %v356, %v717
        %v1029 = vsub.f32 %v357, %v721
        %v1030 = vsub.f32 %v358, %v721
        %v1031 = vsub.f32 %v359, %v721
        %v1032 = vsub.f32 %v360, %v725
        %v1033 = vsub.f32 %v361, %v725
        %v1034 = vsub.f32 %v362, %v725
        %v1035 = vsub.f32 %v363, %v729
        %v1036 = vsub.f32 %v364, %v729
        %v1037 = vsub.f32 %v365, %v729
        %v1038 = vsub.f32 %v366, %v733
        %v1039 = vsub.f32 %v367, %v733
        %v1040 = vsub.f32 %v368, %v733
        %v1041 = vsub.f32 %v369, %v737
        %v1042 = vsub.f32 %v370, %v737
        %v1043 = vsub.f32 %v371, %v737
        %v1044 = vsub.f32 %v372, %v741
        %v1045 = vsub.f32 %v373, %v741
        %v1046 = vsub.f32 %v374, %v741
        %v1047 = vsub.f32 %v375, %v745
        %v1048 = vsub.f32 %v376, %v745
        %v1049 = vsub.f32 %v377, %v745
        %v1050 = vsub.f32 %v378, %v749
        %v1051 = vsub.f32 %v379, %v749
        %v1052 = vsub.f32 %v380, %v749
        %v1053 = vsub.f32 %v381, %v753
        %v1054 = vsub.f32 %v382, %v753
        %v1055 = vsub.f32 %v383, %v753
        %v1056 = vsub.f32 %v384, %v757
        %v1057 = vsub.f32 %v385, %v757
        %v1058 = vsub.f32 %v386, %v757
        %v1059 = vsub.f32 %v387, %v761
        %v1060 = vsub.f32 %v388, %v761
        %v1061 = vsub.f32 %v389, %v761
        %v1062 = vsub.f32 %v390, %v765
        %v1063 = vsub.f32 %v391, %v765
        %v1064 = vsub.f32 %v392, %v765
        %v1065 = vsub.f32 %v393, %v769
        %v1066 = vsub.f32 %v394, %v769
        %v1067 = vsub.f32 %v395, %v769
        %v1068 = vsub.f32 %v396, %v773
        %v1069 = vsub.f32 %v397, %v773
        %v1070 = vsub.f32 %v398, %v773
        %v1071 = vsub.f32 %v399, %v777
        %v1072 = vsub.f32 %v400, %v777
        %v1073 = vsub.f32 %v401, %v777
        %v1074 = vsub.f32 %v402, %v781
        %v1075 = vsub.f32 %v403, %v781
        %v1076 = vsub.f32 %v404, %v781
        %v1077 = vsub.f32 %v405, %v785
        %v1078 = vsub.f32 %v406, %v785
        %v1079 = vsub.f32 %v407, %v785
        %v1080 = vsub.f32 %v408, %v789
        %v1081 = vsub.f32 %v409, %v789
        %v1082 = vsub.f32 %v410, %v789
        %v1083 = vsub.f32 %v411, %v793
        %v1084 = vsub.f32 %v412, %v793
        %v1085 = vsub.f32 %v413, %v793
        %v1086 = vsub.f32 %v414, %v797
        %v1087 = vsub.f32 %v415, %v797
        %v1088 = vsub.f32 %v416, %v797
        %v1089 = vsub.f32 %v417, %v801
        %v1090 = vsub.f32 %v418, %v801
        %v1091 = vsub.f32 %v419, %v801
        %v1092 = vsub.f32 %v420, %v805
        %v1093 = vsub.f32 %v421, %v805
        %v1094 = vsub.f32 %v422, %v805
        %v1095 = vsub.f32 %v423, %v809
        %v1096 = vsub.f32 %v424, %v809
        %v1097 = vsub.f32 %v425, %v809
        %v1098 = vmul.f32 %v810, 1.442695
        %v1099 = vpow.pop %v1098
        %v1100 = vmul.f32 %v811, 1.442695
        %v1101 = vpow.pop %v1100
        %v1102 = vmul.f32 %v812, 1.442695
        %v1103 = vpow.pop %v1102
        %v1104 = vmul.f32 %v813, 1.442695
        %v1105 = vpow.pop %v1104
        %v1106 = vmul.f32 %v814, 1.442695
        %v1107 = vpow.pop %v1106
        %v1108 = vmul.f32 %v815, 1.442695
        %v1109 = vpow.pop %v1108
        %v1110 = vmul.f32 %v816, 1.442695
        %v1111 = vpow.pop %v1110
        %v1112 = vmul.f32 %v817, 1.442695
        %v1113 = vpow.pop %v1112
        %v1114 = vmul.f32 %v818, 1.442695
        %v1115 = vpow.pop %v1114
        %v1116 = vmul.f32 %v819, 1.442695
        %v1117 = vpow.pop %v1116
        %v1118 = vmul.f32 %v820, 1.442695
        %v1119 = vpow.pop %v1118
        %v1120 = vmul.f32 %v821, 1.442695
        %v1121 = vpow.pop %v1120
        %v1122 = vmul.f32 %v822, 1.442695
        %v1123 = vpow.pop %v1122
        %v1124 = vmul.f32 %v823, 1.442695
        %v1125 = vpow.pop %v1124
        %v1126 = vmul.f32 %v824, 1.442695
        %v1127 = vpow.pop %v1126
        %v1128 = vmul.f32 %v825, 1.442695
        %v1129 = vpow.pop %v1128
        %v1130 = vmul.f32 %v826, 1.442695
        %v1131 = vpow.pop %v1130
        %v1132 = vmul.f32 %v827, 1.442695
        %v1133 = vpow.pop %v1132
        %v1134 = vmul.f32 %v828, 1.442695
        %v1135 = vpow.pop %v1134
        %v1136 = vmul.f32 %v829, 1.442695
        %v1137 = vpow.pop %v1136
        %v1138 = vmul.f32 %v830, 1.442695
        %v1139 = vpow.pop %v1138
        %v1140 = vmul.f32 %v831, 1.442695
        %v1141 = vpow.pop %v1140
        %v1142 = vmul.f32 %v832, 1.442695
        %v1143 = vpow.pop %v1142
        %v1144 = vmul.f32 %v833, 1.442695
        %v1145 = vpow.pop %v1144
        %v1146 = vmul.f32 %v834, 1.442695
        %v1147 = vpow.pop %v1146
        %v1148 = vmul.f32 %v835, 1.442695
        %v1149 = vpow.pop %v1148
        %v1150 = vmul.f32 %v836, 1.442695
        %v1151 = vpow.pop %v1150
        %v1152 = vmul.f32 %v837, 1.442695
        %v1153 = vpow.pop %v1152
        %v1154 = vmul.f32 %v838, 1.442695
        %v1155 = vpow.pop %v1154
        %v1156 = vmul.f32 %v839, 1.442695
        %v1157 = vpow.pop %v1156
        %v1158 = vmul.f32 %v840, 1.442695
        %v1159 = vpow.pop %v1158
        %v1160 = vmul.f32 %v841, 1.442695
        %v1161 = vpow.pop %v1160
        %v1162 = vmul.f32 %v842, 1.442695
        %v1163 = vpow.pop %v1162
        %v1164 = vmul.f32 %v843, 1.442695
        %v1165 = vpow.pop %v1164
        %v1166 = vmul.f32 %v844, 1.442695
        %v1167 = vpow.pop %v1166
        %v1168 = vmul.f32 %v845, 1.442695
        %v1169 = vpow.pop %v1168
        %v1170 = vmul.f32 %v846, 1.442695
        %v1171 = vpow.pop %v1170
        %v1172 = vmul.f32 %v847, 1.442695
        %v1173 = vpow.pop %v1172
        %v1174 = vmul.f32 %v848, 1.442695
        %v1175 = vpow.pop %v1174
        %v1176 = vmul.f32 %v849, 1.442695
        %v1177 = vpow.pop %v1176
        %v1178 = vmul.f32 %v850, 1.442695
        %v1179 = vpow.pop %v1178
        %v1180 = vmul.f32 %v851, 1.442695
        %v1181 = vpow.pop %v1180
        %v1182 = vmul.f32 %v852, 1.442695
        %v1183 = vpow.pop %v1182
        %v1184 = vmul.f32 %v853, 1.442695
        %v1185 = vpow.pop %v1184
        %v1186 = vmul.f32 %v854, 1.442695
        %v1187 = vpow.pop %v1186
        %v1188 = vmul.f32 %v855, 1.442695
        %v1189 = vpow.pop %v1188
        %v1190 = vmul.f32 %v856, 1.442695
        %v1191 = vpow.pop %v1190
        %v1192 = vmul.f32 %v857, 1.442695
        %v1193 = vpow.pop %v1192
        %v1194 = vmul.f32 %v858, 1.442695
        %v1195 = vpow.pop %v1194
        %v1196 = vmul.f32 %v859, 1.442695
        %v1197 = vpow.pop %v1196
        %v1198 = vmul.f32 %v860, 1.442695
        %v1199 = vpow.pop %v1198
        %v1200 = vmul.f32 %v861, 1.442695
        %v1201 = vpow.pop %v1200
        %v1202 = vmul.f32 %v862, 1.442695
        %v1203 = vpow.pop %v1202
        %v1204 = vmul.f32 %v863, 1.442695
        %v1205 = vpow.pop %v1204
        %v1206 = vmul.f32 %v864, 1.442695
        %v1207 = vpow.pop %v1206
        %v1208 = vmul.f32 %v865, 1.442695
        %v1209 = vpow.pop %v1208
        %v1210 = vmul.f32 %v866, 1.442695
        %v1211 = vpow.pop %v1210
        %v1212 = vmul.f32 %v867, 1.442695
        %v1213 = vpow.pop %v1212
        %v1214 = vmul.f32 %v868, 1.442695
        %v1215 = vpow.pop %v1214
        %v1216 = vmul.f32 %v869, 1.442695
        %v1217 = vpow.pop %v1216
        %v1218 = vmul.f32 %v870, 1.442695
        %v1219 = vpow.pop %v1218
        %v1220 = vmul.f32 %v871, 1.442695
        %v1221 = vpow.pop %v1220
        %v1222 = vmul.f32 %v872, 1.442695
        %v1223 = vpow.pop %v1222
        %v1224 = vmul.f32 %v873, 1.442695
        %v1225 = vpow.pop %v1224
        %v1226 = vmul.f32 %v874, 1.442695
        %v1227 = vpow.pop %v1226
        %v1228 = vmul.f32 %v875, 1.442695
        %v1229 = vpow.pop %v1228
        %v1230 = vmul.f32 %v876, 1.442695
        %v1231 = vpow.pop %v1230
        %v1232 = vmul.f32 %v877, 1.442695
        %v1233 = vpow.pop %v1232
        %v1234 = vmul.f32 %v878, 1.442695
        %v1235 = vpow.pop %v1234
        %v1236 = vmul.f32 %v879, 1.442695
        %v1237 = vpow.pop %v1236
        %v1238 = vmul.f32 %v880, 1.442695
        %v1239 = vpow.pop %v1238
        %v1240 = vmul.f32 %v881, 1.442695
        %v1241 = vpow.pop %v1240
        %v1242 = vmul.f32 %v882, 1.442695
        %v1243 = vpow.pop %v1242
        %v1244 = vmul.f32 %v883, 1.442695
        %v1245 = vpow.pop %v1244
        %v1246 = vmul.f32 %v884, 1.442695
        %v1247 = vpow.pop %v1246
        %v1248 = vmul.f32 %v885, 1.442695
        %v1249 = vpow.pop %v1248
        %v1250 = vmul.f32 %v886, 1.442695
        %v1251 = vpow.pop %v1250
        %v1252 = vmul.f32 %v887, 1.442695
        %v1253 = vpow.pop %v1252
        %v1254 = vmul.f32 %v888, 1.442695
        %v1255 = vpow.pop %v1254
        %v1256 = vmul.f32 %v889, 1.442695
        %v1257 = vpow.pop %v1256
        %v1258 = vmul.f32 %v890, 1.442695
        %v1259 = vpow.pop %v1258
        %v1260 = vmul.f32 %v891, 1.442695
        %v1261 = vpow.pop %v1260
        %v1262 = vmul.f32 %v892, 1.442695
        %v1263 = vpow.pop %v1262
        %v1264 = vmul.f32 %v893, 1.442695
        %v1265 = vpow.pop %v1264
        %v1266 = vmul.f32 %v894, 1.442695
        %v1267 = vpow.pop %v1266
        %v1268 = vmul.f32 %v895, 1.442695
        %v1269 = vpow.pop %v1268
        %v1270 = vmul.f32 %v896, 1.442695
        %v1271 = vpow.pop %v1270
        %v1272 = vmul.f32 %v897, 1.442695
        %v1273 = vpow.pop %v1272
        %v1274 = vmul.f32 %v898, 1.442695
        %v1275 = vpow.pop %v1274
        %v1276 = vmul.f32 %v899, 1.442695
        %v1277 = vpow.pop %v1276
        %v1278 = vmul.f32 %v900, 1.442695
        %v1279 = vpow.pop %v1278
        %v1280 = vmul.f32 %v901, 1.442695
        %v1281 = vpow.pop %v1280
        %v1282 = vmul.f32 %v902, 1.442695
        %v1283 = vpow.pop %v1282
        %v1284 = vmul.f32 %v903, 1.442695
        %v1285 = vpow.pop %v1284
        %v1286 = vmul.f32 %v904, 1.442695
        %v1287 = vpow.pop %v1286
        %v1288 = vmul.f32 %v905, 1.442695
        %v1289 = vpow.pop %v1288
        %v1290 = vmul.f32 %v906, 1.442695
        %v1291 = vpow.pop %v1290
        %v1292 = vmul.f32 %v907, 1.442695
        %v1293 = vpow.pop %v1292
        %v1294 = vmul.f32 %v908, 1.442695
        %v1295 = vpow.pop %v1294
        %v1296 = vmul.f32 %v909, 1.442695
        %v1297 = vpow.pop %v1296
        %v1298 = vmul.f32 %v910, 1.442695
        %v1299 = vpow.pop %v1298
        %v1300 = vmul.f32 %v911, 1.442695
        %v1301 = vpow.pop %v1300
        %v1302 = vmul.f32 %v912, 1.442695
        %v1303 = vpow.pop %v1302
        %v1304 = vmul.f32 %v913, 1.442695
        %v1305 = vpow.pop %v1304
        %v1306 = vmul.f32 %v914, 1.442695
        %v1307 = vpow.pop %v1306
        %v1308 = vmul.f32 %v915, 1.442695
        %v1309 = vpow.pop %v1308
        %v1310 = vmul.f32 %v916, 1.442695
        %v1311 = vpow.pop %v1310
        %v1312 = vmul.f32 %v917, 1.442695
        %v1313 = vpow.pop %v1312
        %v1314 = vmul.f32 %v918, 1.442695
        %v1315 = vpow.pop %v1314
        %v1316 = vmul.f32 %v919, 1.442695
        %v1317 = vpow.pop %v1316
        %v1318 = vmul.f32 %v920, 1.442695
        %v1319 = vpow.pop %v1318
        %v1320 = vmul.f32 %v921, 1.442695
        %v1321 = vpow.pop %v1320
        %v1322 = vmul.f32 %v922, 1.442695
        %v1323 = vpow.pop %v1322
        %v1324 = vmul.f32 %v923, 1.442695
        %v1325 = vpow.pop %v1324
        %v1326 = vmul.f32 %v924, 1.442695
        %v1327 = vpow.pop %v1326
        %v1328 = vmul.f32 %v925, 1.442695
        %v1329 = vpow.pop %v1328
        %v1330 = vmul.f32 %v926, 1.442695
        %v1331 = vpow.pop %v1330
        %v1332 = vmul.f32 %v927, 1.442695
        %v1333 = vpow.pop %v1332
        %v1334 = vmul.f32 %v928, 1.442695
        %v1335 = vpow.pop %v1334
        %v1336 = vmul.f32 %v929, 1.442695
        %v1337 = vpow.pop %v1336
        %v1338 = vmul.f32 %v930, 1.442695
        %v1339 = vpow.pop %v1338
        %v1340 = vmul.f32 %v931, 1.442695
        %v1341 = vpow.pop %v1340
        %v1342 = vmul.f32 %v932, 1.442695
        %v1343 = vpow.pop %v1342
        %v1344 = vmul.f32 %v933, 1.442695
        %v1345 = vpow.pop %v1344
        %v1346 = vmul.f32 %v934, 1.442695
        %v1347 = vpow.pop %v1346
        %v1348 = vmul.f32 %v935, 1.442695
        %v1349 = vpow.pop %v1348
        %v1350 = vmul.f32 %v936, 1.442695
        %v1351 = vpow.pop %v1350
        %v1352 = vmul.f32 %v937, 1.442695
        %v1353 = vpow.pop %v1352
        %v1354 = vmul.f32 %v938, 1.442695
        %v1355 = vpow.pop %v1354
        %v1356 = vmul.f32 %v939, 1.442695
        %v1357 = vpow.pop %v1356
        %v1358 = vmul.f32 %v940, 1.442695
        %v1359 = vpow.pop %v1358
        %v1360 = vmul.f32 %v941, 1.442695
        %v1361 = vpow.pop %v1360
        %v1362 = vmul.f32 %v942, 1.442695
        %v1363 = vpow.pop %v1362
        %v1364 = vmul.f32 %v943, 1.442695
        %v1365 = vpow.pop %v1364
        %v1366 = vmul.f32 %v944, 1.442695
        %v1367 = vpow.pop %v1366
        %v1368 = vmul.f32 %v945, 1.442695
        %v1369 = vpow.pop %v1368
        %v1370 = vmul.f32 %v946, 1.442695
        %v1371 = vpow.pop %v1370
        %v1372 = vmul.f32 %v947, 1.442695
        %v1373 = vpow.pop %v1372
        %v1374 = vmul.f32 %v948, 1.442695
        %v1375 = vpow.pop %v1374
        %v1376 = vmul.f32 %v949, 1.442695
        %v1377 = vpow.pop %v1376
        %v1378 = vmul.f32 %v950, 1.442695
        %v1379 = vpow.pop %v1378
        %v1380 = vmul.f32 %v951, 1.442695
        %v1381 = vpow.pop %v1380
        %v1382 = vmul.f32 %v952, 1.442695
        %v1383 = vpow.pop %v1382
        %v1384 = vmul.f32 %v953, 1.442695
        %v1385 = vpow.pop %v1384
        %v1386 = vmul.f32 %v954, 1.442695
        %v1387 = vpow.pop %v1386
        %v1388 = vmul.f32 %v955, 1.442695
        %v1389 = vpow.pop %v1388
        %v1390 = vmul.f32 %v956, 1.442695
        %v1391 = vpow.pop %v1390
        %v1392 = vmul.f32 %v957, 1.442695
        %v1393 = vpow.pop %v1392
        %v1394 = vmul.f32 %v958, 1.442695
        %v1395 = vpow.pop %v1394
        %v1396 = vmul.f32 %v959, 1.442695
        %v1397 = vpow.pop %v1396
        %v1398 = vmul.f32 %v960, 1.442695
        %v1399 = vpow.pop %v1398
        %v1400 = vmul.f32 %v961, 1.442695
        %v1401 = vpow.pop %v1400
        %v1402 = vmul.f32 %v962, 1.442695
        %v1403 = vpow.pop %v1402
        %v1404 = vmul.f32 %v963, 1.442695
        %v1405 = vpow.pop %v1404
        %v1406 = vmul.f32 %v964, 1.442695
        %v1407 = vpow.pop %v1406
        %v1408 = vmul.f32 %v965, 1.442695
        %v1409 = vpow.pop %v1408
        %v1410 = vmul.f32 %v966, 1.442695
        %v1411 = vpow.pop %v1410
        %v1412 = vmul.f32 %v967, 1.442695
        %v1413 = vpow.pop %v1412
        %v1414 = vmul.f32 %v968, 1.442695
        %v1415 = vpow.pop %v1414
        %v1416 = vmul.f32 %v969, 1.442695
        %v1417 = vpow.pop %v1416
        %v1418 = vmul.f32 %v970, 1.442695
        %v1419 = vpow.pop %v1418
        %v1420 = vmul.f32 %v971, 1.442695
        %v1421 = vpow.pop %v1420
        %v1422 = vmul.f32 %v972, 1.442695
        %v1423 = vpow.pop %v1422
        %v1424 = vmul.f32 %v973, 1.442695
        %v1425 = vpow.pop %v1424
        %v1426 = vmul.f32 %v974, 1.442695
        %v1427 = vpow.pop %v1426
        %v1428 = vmul.f32 %v975, 1.442695
        %v1429 = vpow.pop %v1428
        %v1430 = vmul.f32 %v976, 1.442695
        %v1431 = vpow.pop %v1430
        %v1432 = vmul.f32 %v977, 1.442695
        %v1433 = vpow.pop %v1432
        %v1434 = vmul.f32 %v978, 1.442695
        %v1435 = vpow.pop %v1434
        %v1436 = vmul.f32 %v979, 1.442695
        %v1437 = vpow.pop %v1436
        %v1438 = vmul.f32 %v980, 1.442695
        %v1439 = vpow.pop %v1438
        %v1440 = vmul.f32 %v981, 1.442695
        %v1441 = vpow.pop %v1440
        %v1442 = vmul.f32 %v982, 1.442695
        %v1443 = vpow.pop %v1442
        %v1444 = vmul.f32 %v983, 1.442695
        %v1445 = vpow.pop %v1444
        %v1446 = vmul.f32 %v984, 1.442695
        %v1447 = vpow.pop %v1446
        %v1448 = vmul.f32 %v985, 1.442695
        %v1449 = vpow.pop %v1448
        %v1450 = vmul.f32 %v986, 1.442695
        %v1451 = vpow.pop %v1450
        %v1452 = vmul.f32 %v987, 1.442695
        %v1453 = vpow.pop %v1452
        %v1454 = vmul.f32 %v988, 1.442695
        %v1455 = vpow.pop %v1454
        %v1456 = vmul.f32 %v989, 1.442695
        %v1457 = vpow.pop %v1456
        %v1458 = vmul.f32 %v990, 1.442695
        %v1459 = vpow.pop %v1458
        %v1460 = vmul.f32 %v991, 1.442695
        %v1461 = vpow.pop %v1460
        %v1462 = vmul.f32 %v992, 1.442695
        %v1463 = vpow.pop %v1462
        %v1464 = vmul.f32 %v993, 1.442695
        %v1465 = vpow.pop %v1464
        %v1466 = vmul.f32 %v994, 1.442695
        %v1467 = vpow.pop %v1466
        %v1468 = vmul.f32 %v995, 1.442695
        %v1469 = vpow.pop %v1468
        %v1470 = vmul.f32 %v996, 1.442695
        %v1471 = vpow.pop %v1470
        %v1472 = vmul.f32 %v997, 1.442695
        %v1473 = vpow.pop %v1472
        %v1474 = vmul.f32 %v998, 1.442695
        %v1475 = vpow.pop %v1474
        %v1476 = vmul.f32 %v999, 1.442695
        %v1477 = vpow.pop %v1476
        %v1478 = vmul.f32 %v1000, 1.442695
        %v1479 = vpow.pop %v1478
        %v1480 = vmul.f32 %v1001, 1.442695
        %v1481 = vpow.pop %v1480
        %v1482 = vmul.f32 %v1002, 1.442695
        %v1483 = vpow.pop %v1482
        %v1484 = vmul.f32 %v1003, 1.442695
        %v1485 = vpow.pop %v1484
        %v1486 = vmul.f32 %v1004, 1.442695
        %v1487 = vpow.pop %v1486
        %v1488 = vmul.f32 %v1005, 1.442695
        %v1489 = vpow.pop %v1488
        %v1490 = vmul.f32 %v1006, 1.442695
        %v1491 = vpow.pop %v1490
        %v1492 = vmul.f32 %v1007, 1.442695
        %v1493 = vpow.pop %v1492
        %v1494 = vmul.f32 %v1008, 1.442695
        %v1495 = vpow.pop %v1494
        %v1496 = vmul.f32 %v1009, 1.442695
        %v1497 = vpow.pop %v1496
        %v1498 = vmul.f32 %v1010, 1.442695
        %v1499 = vpow.pop %v1498
        %v1500 = vmul.f32 %v1011, 1.442695
        %v1501 = vpow.pop %v1500
        %v1502 = vmul.f32 %v1012, 1.442695
        %v1503 = vpow.pop %v1502
        %v1504 = vmul.f32 %v1013, 1.442695
        %v1505 = vpow.pop %v1504
        %v1506 = vmul.f32 %v1014, 1.442695
        %v1507 = vpow.pop %v1506
        %v1508 = vmul.f32 %v1015, 1.442695
        %v1509 = vpow.pop %v1508
        %v1510 = vmul.f32 %v1016, 1.442695
        %v1511 = vpow.pop %v1510
        %v1512 = vmul.f32 %v1017, 1.442695
        %v1513 = vpow.pop %v1512
        %v1514 = vmul.f32 %v1018, 1.442695
        %v1515 = vpow.pop %v1514
        %v1516 = vmul.f32 %v1019, 1.442695
        %v1517 = vpow.pop %v1516
        %v1518 = vmul.f32 %v1020, 1.442695
        %v1519 = vpow.pop %v1518
        %v1520 = vmul.f32 %v1021, 1.442695
        %v1521 = vpow.pop %v1520
        %v1522 = vmul.f32 %v1022, 1.442695
        %v1523 = vpow.pop %v1522
        %v1524 = vmul.f32 %v1023, 1.442695
        %v1525 = vpow.pop %v1524
        %v1526 = vmul.f32 %v1024, 1.442695
        %v1527 = vpow.pop %v1526
        %v1528 = vmul.f32 %v1025, 1.442695
        %v1529 = vpow.pop %v1528
        %v1530 = vmul.f32 %v1026, 1.442695
        %v1531 = vpow.pop %v1530
        %v1532 = vmul.f32 %v1027, 1.442695
        %v1533 = vpow.pop %v1532
        %v1534 = vmul.f32 %v1028, 1.442695
        %v1535 = vpow.pop %v1534
        %v1536 = vmul.f32 %v1029, 1.442695
        %v1537 = vpow.pop %v1536
        %v1538 = vmul.f32 %v1030, 1.442695
        %v1539 = vpow.pop %v1538
        %v1540 = vmul.f32 %v1031, 1.442695
        %v1541 = vpow.pop %v1540
        %v1542 = vmul.f32 %v1032, 1.442695
        %v1543 = vpow.pop %v1542
        %v1544 = vmul.f32 %v1033, 1.442695
        %v1545 = vpow.pop %v1544
        %v1546 = vmul.f32 %v1034, 1.442695
        %v1547 = vpow.pop %v1546
        %v1548 = vmul.f32 %v1035, 1.442695
        %v1549 = vpow.pop %v1548
        %v1550 = vmul.f32 %v1036, 1.442695
        %v1551 = vpow.pop %v1550
        %v1552 = vmul.f32 %v1037, 1.442695
        %v1553 = vpow.pop %v1552
        %v1554 = vmul.f32 %v1038, 1.442695
        %v1555 = vpow.pop %v1554
        %v1556 = vmul.f32 %v1039, 1.442695
        %v1557 = vpow.pop %v1556
        %v1558 = vmul.f32 %v1040, 1.442695
        %v1559 = vpow.pop %v1558
        %v1560 = vmul.f32 %v1041, 1.442695
        %v1561 = vpow.pop %v1560
        %v1562 = vmul.f32 %v1042, 1.442695
        %v1563 = vpow.pop %v1562
        %v1564 = vmul.f32 %v1043, 1.442695
        %v1565 = vpow.pop %v1564
        %v1566 = vmul.f32 %v1044, 1.442695
        %v1567 = vpow.pop %v1566
        %v1568 = vmul.f32 %v1045, 1.442695
        %v1569 = vpow.pop %v1568
        %v1570 = vmul.f32 %v1046, 1.442695
        %v1571 = vpow.pop %v1570
        %v1572 = vmul.f32 %v1047, 1.442695
        %v1573 = vpow.pop %v1572
        %v1574 = vmul.f32 %v1048, 1.442695
        %v1575 = vpow.pop %v1574
        %v1576 = vmul.f32 %v1049, 1.442695
        %v1577 = vpow.pop %v1576
        %v1578 = vmul.f32 %v1050, 1.442695
        %v1579 = vpow.pop %v1578
        %v1580 = vmul.f32 %v1051, 1.442695
        %v1581 = vpow.pop %v1580
        %v1582 = vmul.f32 %v1052, 1.442695
        %v1583 = vpow.pop %v1582
        %v1584 = vmul.f32 %v1053, 1.442695
        %v1585 = vpow.pop %v1584
        %v1586 = vmul.f32 %v1054, 1.442695
        %v1587 = vpow.pop %v1586
        %v1588 = vmul.f32 %v1055, 1.442695
        %v1589 = vpow.pop %v1588
        %v1590 = vmul.f32 %v1056, 1.442695
        %v1591 = vpow.pop %v1590
        %v1592 = vmul.f32 %v1057, 1.442695
        %v1593 = vpow.pop %v1592
        %v1594 = vmul.f32 %v1058, 1.442695
        %v1595 = vpow.pop %v1594
        %v1596 = vmul.f32 %v1059, 1.442695
        %v1597 = vpow.pop %v1596
        %v1598 = vmul.f32 %v1060, 1.442695
        %v1599 = vpow.pop %v1598
        %v1600 = vmul.f32 %v1061, 1.442695
        %v1601 = vpow.pop %v1600
        %v1602 = vmul.f32 %v1062, 1.442695
        %v1603 = vpow.pop %v1602
        %v1604 = vmul.f32 %v1063, 1.442695
        %v1605 = vpow.pop %v1604
        %v1606 = vmul.f32 %v1064, 1.442695
        %v1607 = vpow.pop %v1606
        %v1608 = vmul.f32 %v1065, 1.442695
        %v1609 = vpow.pop %v1608
        %v1610 = vmul.f32 %v1066, 1.442695
        %v1611 = vpow.pop %v1610
        %v1612 = vmul.f32 %v1067, 1.442695
        %v1613 = vpow.pop %v1612
        %v1614 = vmul.f32 %v1068, 1.442695
        %v1615 = vpow.pop %v1614
        %v1616 = vmul.f32 %v1069, 1.442695
        %v1617 = vpow.pop %v1616
        %v1618 = vmul.f32 %v1070, 1.442695
        %v1619 = vpow.pop %v1618
        %v1620 = vmul.f32 %v1071, 1.442695
        %v1621 = vpow.pop %v1620
        %v1622 = vmul.f32 %v1072, 1.442695
        %v1623 = vpow.pop %v1622
        %v1624 = vmul.f32 %v1073, 1.442695
        %v1625 = vpow.pop %v1624
        %v1626 = vmul.f32 %v1074, 1.442695
        %v1627 = vpow.pop %v1626
        %v1628 = vmul.f32 %v1075, 1.442695
        %v1629 = vpow.pop %v1628
        %v1630 = vmul.f32 %v1076, 1.442695
        %v1631 = vpow.pop %v1630
        %v1632 = vmul.f32 %v1077, 1.442695
        %v1633 = vpow.pop %v1632
        %v1634 = vmul.f32 %v1078, 1.442695
        %v1635 = vpow.pop %v1634
        %v1636 = vmul.f32 %v1079, 1.442695
        %v1637 = vpow.pop %v1636
        %v1638 = vmul.f32 %v1080, 1.442695
        %v1639 = vpow.pop %v1638
        %v1640 = vmul.f32 %v1081, 1.442695
        %v1641 = vpow.pop %v1640
        %v1642 = vmul.f32 %v1082, 1.442695
        %v1643 = vpow.pop %v1642
        %v1644 = vmul.f32 %v1083, 1.442695
        %v1645 = vpow.pop %v1644
        %v1646 = vmul.f32 %v1084, 1.442695
        %v1647 = vpow.pop %v1646
        %v1648 = vmul.f32 %v1085, 1.442695
        %v1649 = vpow.pop %v1648
        %v1650 = vmul.f32 %v1086, 1.442695
        %v1651 = vpow.pop %v1650
        %v1652 = vmul.f32 %v1087, 1.442695
        %v1653 = vpow.pop %v1652
        %v1654 = vmul.f32 %v1088, 1.442695
        %v1655 = vpow.pop %v1654
        %v1656 = vmul.f32 %v1089, 1.442695
        %v1657 = vpow.pop %v1656
        %v1658 = vmul.f32 %v1090, 1.442695
        %v1659 = vpow.pop %v1658
        %v1660 = vmul.f32 %v1091, 1.442695
        %v1661 = vpow.pop %v1660
        %v1662 = vmul.f32 %v1092, 1.442695
        %v1663 = vpow.pop %v1662
        %v1664 = vmul.f32 %v1093, 1.442695
        %v1665 = vpow.pop %v1664
        %v1666 = vmul.f32 %v1094, 1.442695
        %v1667 = vpow.pop %v1666
        %v1668 = vmul.f32 %v1095, 1.442695
        %v1669 = vpow.pop %v1668
        %v1670 = vmul.f32 %v1096, 1.442695
        %v1671 = vpow.pop %v1670
        %v1672 = vmul.f32 %v1097, 1.442695
        %v1673 = vpow.pop %v1672
        %v1674 = vadd.f32 %v1099, %v1101
        %v1675 = vadd.f32 %v1674, %v1103
        %1676 = vadd.xlane.f32.xlu0 %v1675
        %v1677 = vpop.xlane.xlu0 %1676
        %v1678 = vadd.f32 %v1105, %v1107
        %v1679 = vadd.f32 %v1678, %v1109
        %1680 = vadd.xlane.f32.xlu0 %v1679
        %v1681 = vpop.xlane.xlu0 %1680
        %v1682 = vadd.f32 %v1111, %v1113
        %v1683 = vadd.f32 %v1682, %v1115
        %1684 = vadd.xlane.f32.xlu0 %v1683
        %v1685 = vpop.xlane.xlu0 %1684
        %v1686 = vadd.f32 %v1117, %v1119
        %v1687 = vadd.f32 %v1686, %v1121
        %1688 = vadd.xlane.f32.xlu0 %v1687
        %v1689 = vpop.xlane.xlu0 %1688
        %v1690 = vadd.f32 %v1123, %v1125
        %v1691 = vadd.f32 %v1690, %v1127
        %1692 = vadd.xlane.f32.xlu0 %v1691
        %v1693 = vpop.xlane.xlu0 %1692
        %v1694 = vadd.f32 %v1129, %v1131
        %v1695 = vadd.f32 %v1694, %v1133
        %1696 = vadd.xlane.f32.xlu0 %v1695
        %v1697 = vpop.xlane.xlu0 %1696
        %v1698 = vadd.f32 %v1135, %v1137
        %v1699 = vadd.f32 %v1698, %v1139
        %1700 = vadd.xlane.f32.xlu0 %v1699
        %v1701 = vpop.xlane.xlu0 %1700
        %v1702 = vadd.f32 %v1141, %v1143
        %v1703 = vadd.f32 %v1702, %v1145
        %1704 = vadd.xlane.f32.xlu0 %v1703
        %v1705 = vpop.xlane.xlu0 %1704
        %v1706 = vadd.f32 %v1147, %v1149
        %v1707 = vadd.f32 %v1706, %v1151
        %1708 = vadd.xlane.f32.xlu0 %v1707
        %v1709 = vpop.xlane.xlu0 %1708
        %v1710 = vadd.f32 %v1153, %v1155
        %v1711 = vadd.f32 %v1710, %v1157
        %1712 = vadd.xlane.f32.xlu0 %v1711
        %v1713 = vpop.xlane.xlu0 %1712
        %v1714 = vadd.f32 %v1159, %v1161
        %v1715 = vadd.f32 %v1714, %v1163
        %1716 = vadd.xlane.f32.xlu0 %v1715
        %v1717 = vpop.xlane.xlu0 %1716
        %v1718 = vadd.f32 %v1165, %v1167
        %v1719 = vadd.f32 %v1718, %v1169
        %1720 = vadd.xlane.f32.xlu0 %v1719
        %v1721 = vpop.xlane.xlu0 %1720
        %v1722 = vadd.f32 %v1171, %v1173
        %v1723 = vadd.f32 %v1722, %v1175
        %1724 = vadd.xlane.f32.xlu0 %v1723
        %v1725 = vpop.xlane.xlu0 %1724
        %v1726 = vadd.f32 %v1177, %v1179
        %v1727 = vadd.f32 %v1726, %v1181
        %1728 = vadd.xlane.f32.xlu0 %v1727
        %v1729 = vpop.xlane.xlu0 %1728
        %v1730 = vadd.f32 %v1183, %v1185
        %v1731 = vadd.f32 %v1730, %v1187
        %1732 = vadd.xlane.f32.xlu0 %v1731
        %v1733 = vpop.xlane.xlu0 %1732
        %v1734 = vadd.f32 %v1189, %v1191
        %v1735 = vadd.f32 %v1734, %v1193
        %1736 = vadd.xlane.f32.xlu0 %v1735
        %v1737 = vpop.xlane.xlu0 %1736
        %v1738 = vadd.f32 %v1195, %v1197
        %v1739 = vadd.f32 %v1738, %v1199
        %1740 = vadd.xlane.f32.xlu0 %v1739
        %v1741 = vpop.xlane.xlu0 %1740
        %v1742 = vadd.f32 %v1201, %v1203
        %v1743 = vadd.f32 %v1742, %v1205
        %1744 = vadd.xlane.f32.xlu0 %v1743
        %v1745 = vpop.xlane.xlu0 %1744
        %v1746 = vadd.f32 %v1207, %v1209
        %v1747 = vadd.f32 %v1746, %v1211
        %1748 = vadd.xlane.f32.xlu0 %v1747
        %v1749 = vpop.xlane.xlu0 %1748
        %v1750 = vadd.f32 %v1213, %v1215
        %v1751 = vadd.f32 %v1750, %v1217
        %1752 = vadd.xlane.f32.xlu0 %v1751
        %v1753 = vpop.xlane.xlu0 %1752
        %v1754 = vadd.f32 %v1219, %v1221
        %v1755 = vadd.f32 %v1754, %v1223
        %1756 = vadd.xlane.f32.xlu0 %v1755
        %v1757 = vpop.xlane.xlu0 %1756
        %v1758 = vadd.f32 %v1225, %v1227
        %v1759 = vadd.f32 %v1758, %v1229
        %1760 = vadd.xlane.f32.xlu0 %v1759
        %v1761 = vpop.xlane.xlu0 %1760
        %v1762 = vadd.f32 %v1231, %v1233
        %v1763 = vadd.f32 %v1762, %v1235
        %1764 = vadd.xlane.f32.xlu0 %v1763
        %v1765 = vpop.xlane.xlu0 %1764
        %v1766 = vadd.f32 %v1237, %v1239
        %v1767 = vadd.f32 %v1766, %v1241
        %1768 = vadd.xlane.f32.xlu0 %v1767
        %v1769 = vpop.xlane.xlu0 %1768
        %v1770 = vadd.f32 %v1243, %v1245
        %v1771 = vadd.f32 %v1770, %v1247
        %1772 = vadd.xlane.f32.xlu0 %v1771
        %v1773 = vpop.xlane.xlu0 %1772
        %v1774 = vadd.f32 %v1249, %v1251
        %v1775 = vadd.f32 %v1774, %v1253
        %1776 = vadd.xlane.f32.xlu0 %v1775
        %v1777 = vpop.xlane.xlu0 %1776
        %v1778 = vadd.f32 %v1255, %v1257
        %v1779 = vadd.f32 %v1778, %v1259
        %1780 = vadd.xlane.f32.xlu0 %v1779
        %v1781 = vpop.xlane.xlu0 %1780
        %v1782 = vadd.f32 %v1261, %v1263
        %v1783 = vadd.f32 %v1782, %v1265
        %1784 = vadd.xlane.f32.xlu0 %v1783
        %v1785 = vpop.xlane.xlu0 %1784
        %v1786 = vadd.f32 %v1267, %v1269
        %v1787 = vadd.f32 %v1786, %v1271
        %1788 = vadd.xlane.f32.xlu0 %v1787
        %v1789 = vpop.xlane.xlu0 %1788
        %v1790 = vadd.f32 %v1273, %v1275
        %v1791 = vadd.f32 %v1790, %v1277
        %1792 = vadd.xlane.f32.xlu0 %v1791
        %v1793 = vpop.xlane.xlu0 %1792
        %v1794 = vadd.f32 %v1279, %v1281
        %v1795 = vadd.f32 %v1794, %v1283
        %1796 = vadd.xlane.f32.xlu0 %v1795
        %v1797 = vpop.xlane.xlu0 %1796
        %v1798 = vadd.f32 %v1285, %v1287
        %v1799 = vadd.f32 %v1798, %v1289
        %1800 = vadd.xlane.f32.xlu0 %v1799
        %v1801 = vpop.xlane.xlu0 %1800
        %v1802 = vadd.f32 %v1291, %v1293
        %v1803 = vadd.f32 %v1802, %v1295
        %1804 = vadd.xlane.f32.xlu0 %v1803
        %v1805 = vpop.xlane.xlu0 %1804
        %v1806 = vadd.f32 %v1297, %v1299
        %v1807 = vadd.f32 %v1806, %v1301
        %1808 = vadd.xlane.f32.xlu0 %v1807
        %v1809 = vpop.xlane.xlu0 %1808
        %v1810 = vadd.f32 %v1303, %v1305
        %v1811 = vadd.f32 %v1810, %v1307
        %1812 = vadd.xlane.f32.xlu0 %v1811
        %v1813 = vpop.xlane.xlu0 %1812
        %v1814 = vadd.f32 %v1309, %v1311
        %v1815 = vadd.f32 %v1814, %v1313
        %1816 = vadd.xlane.f32.xlu0 %v1815
        %v1817 = vpop.xlane.xlu0 %1816
        %v1818 = vadd.f32 %v1315, %v1317
        %v1819 = vadd.f32 %v1818, %v1319
        %1820 = vadd.xlane.f32.xlu0 %v1819
        %v1821 = vpop.xlane.xlu0 %1820
        %v1822 = vadd.f32 %v1321, %v1323
        %v1823 = vadd.f32 %v1822, %v1325
        %1824 = vadd.xlane.f32.xlu0 %v1823
        %v1825 = vpop.xlane.xlu0 %1824
        %v1826 = vadd.f32 %v1327, %v1329
        %v1827 = vadd.f32 %v1826, %v1331
        %1828 = vadd.xlane.f32.xlu0 %v1827
        %v1829 = vpop.xlane.xlu0 %1828
        %v1830 = vadd.f32 %v1333, %v1335
        %v1831 = vadd.f32 %v1830, %v1337
        %1832 = vadd.xlane.f32.xlu0 %v1831
        %v1833 = vpop.xlane.xlu0 %1832
        %v1834 = vadd.f32 %v1339, %v1341
        %v1835 = vadd.f32 %v1834, %v1343
        %1836 = vadd.xlane.f32.xlu0 %v1835
        %v1837 = vpop.xlane.xlu0 %1836
        %v1838 = vadd.f32 %v1345, %v1347
        %v1839 = vadd.f32 %v1838, %v1349
        %1840 = vadd.xlane.f32.xlu0 %v1839
        %v1841 = vpop.xlane.xlu0 %1840
        %v1842 = vadd.f32 %v1351, %v1353
        %v1843 = vadd.f32 %v1842, %v1355
        %1844 = vadd.xlane.f32.xlu0 %v1843
        %v1845 = vpop.xlane.xlu0 %1844
        %v1846 = vadd.f32 %v1357, %v1359
        %v1847 = vadd.f32 %v1846, %v1361
        %1848 = vadd.xlane.f32.xlu0 %v1847
        %v1849 = vpop.xlane.xlu0 %1848
        %v1850 = vadd.f32 %v1363, %v1365
        %v1851 = vadd.f32 %v1850, %v1367
        %1852 = vadd.xlane.f32.xlu0 %v1851
        %v1853 = vpop.xlane.xlu0 %1852
        %v1854 = vadd.f32 %v1369, %v1371
        %v1855 = vadd.f32 %v1854, %v1373
        %1856 = vadd.xlane.f32.xlu0 %v1855
        %v1857 = vpop.xlane.xlu0 %1856
        %v1858 = vadd.f32 %v1375, %v1377
        %v1859 = vadd.f32 %v1858, %v1379
        %1860 = vadd.xlane.f32.xlu0 %v1859
        %v1861 = vpop.xlane.xlu0 %1860
        %v1862 = vadd.f32 %v1381, %v1383
        %v1863 = vadd.f32 %v1862, %v1385
        %1864 = vadd.xlane.f32.xlu0 %v1863
        %v1865 = vpop.xlane.xlu0 %1864
        %v1866 = vadd.f32 %v1387, %v1389
        %v1867 = vadd.f32 %v1866, %v1391
        %1868 = vadd.xlane.f32.xlu0 %v1867
        %v1869 = vpop.xlane.xlu0 %1868
        %v1870 = vadd.f32 %v1393, %v1395
        %v1871 = vadd.f32 %v1870, %v1397
        %1872 = vadd.xlane.f32.xlu0 %v1871
        %v1873 = vpop.xlane.xlu0 %1872
        %v1874 = vadd.f32 %v1399, %v1401
        %v1875 = vadd.f32 %v1874, %v1403
        %1876 = vadd.xlane.f32.xlu0 %v1875
        %v1877 = vpop.xlane.xlu0 %1876
        %v1878 = vadd.f32 %v1405, %v1407
        %v1879 = vadd.f32 %v1878, %v1409
        %1880 = vadd.xlane.f32.xlu0 %v1879
        %v1881 = vpop.xlane.xlu0 %1880
        %v1882 = vadd.f32 %v1411, %v1413
        %v1883 = vadd.f32 %v1882, %v1415
        %1884 = vadd.xlane.f32.xlu0 %v1883
        %v1885 = vpop.xlane.xlu0 %1884
        %v1886 = vadd.f32 %v1417, %v1419
        %v1887 = vadd.f32 %v1886, %v1421
        %1888 = vadd.xlane.f32.xlu0 %v1887
        %v1889 = vpop.xlane.xlu0 %1888
        %v1890 = vadd.f32 %v1423, %v1425
        %v1891 = vadd.f32 %v1890, %v1427
        %1892 = vadd.xlane.f32.xlu0 %v1891
        %v1893 = vpop.xlane.xlu0 %1892
        %v1894 = vadd.f32 %v1429, %v1431
        %v1895 = vadd.f32 %v1894, %v1433
        %1896 = vadd.xlane.f32.xlu0 %v1895
        %v1897 = vpop.xlane.xlu0 %1896
        %v1898 = vadd.f32 %v1435, %v1437
        %v1899 = vadd.f32 %v1898, %v1439
        %1900 = vadd.xlane.f32.xlu0 %v1899
        %v1901 = vpop.xlane.xlu0 %1900
        %v1902 = vadd.f32 %v1441, %v1443
        %v1903 = vadd.f32 %v1902, %v1445
        %1904 = vadd.xlane.f32.xlu0 %v1903
        %v1905 = vpop.xlane.xlu0 %1904
        %v1906 = vadd.f32 %v1447, %v1449
        %v1907 = vadd.f32 %v1906, %v1451
        %1908 = vadd.xlane.f32.xlu0 %v1907
        %v1909 = vpop.xlane.xlu0 %1908
        %v1910 = vadd.f32 %v1453, %v1455
        %v1911 = vadd.f32 %v1910, %v1457
        %1912 = vadd.xlane.f32.xlu0 %v1911
        %v1913 = vpop.xlane.xlu0 %1912
        %v1914 = vadd.f32 %v1459, %v1461
        %v1915 = vadd.f32 %v1914, %v1463
        %1916 = vadd.xlane.f32.xlu0 %v1915
        %v1917 = vpop.xlane.xlu0 %1916
        %v1918 = vadd.f32 %v1465, %v1467
        %v1919 = vadd.f32 %v1918, %v1469
        %1920 = vadd.xlane.f32.xlu0 %v1919
        %v1921 = vpop.xlane.xlu0 %1920
        %v1922 = vadd.f32 %v1471, %v1473
        %v1923 = vadd.f32 %v1922, %v1475
        %1924 = vadd.xlane.f32.xlu0 %v1923
        %v1925 = vpop.xlane.xlu0 %1924
        %v1926 = vadd.f32 %v1477, %v1479
        %v1927 = vadd.f32 %v1926, %v1481
        %1928 = vadd.xlane.f32.xlu0 %v1927
        %v1929 = vpop.xlane.xlu0 %1928
        %v1930 = vadd.f32 %v1483, %v1485
        %v1931 = vadd.f32 %v1930, %v1487
        %1932 = vadd.xlane.f32.xlu0 %v1931
        %v1933 = vpop.xlane.xlu0 %1932
        %v1934 = vadd.f32 %v1489, %v1491
        %v1935 = vadd.f32 %v1934, %v1493
        %1936 = vadd.xlane.f32.xlu0 %v1935
        %v1937 = vpop.xlane.xlu0 %1936
        %v1938 = vadd.f32 %v1495, %v1497
        %v1939 = vadd.f32 %v1938, %v1499
        %1940 = vadd.xlane.f32.xlu0 %v1939
        %v1941 = vpop.xlane.xlu0 %1940
        %v1942 = vadd.f32 %v1501, %v1503
        %v1943 = vadd.f32 %v1942, %v1505
        %1944 = vadd.xlane.f32.xlu0 %v1943
        %v1945 = vpop.xlane.xlu0 %1944
        %v1946 = vadd.f32 %v1507, %v1509
        %v1947 = vadd.f32 %v1946, %v1511
        %1948 = vadd.xlane.f32.xlu0 %v1947
        %v1949 = vpop.xlane.xlu0 %1948
        %v1950 = vadd.f32 %v1513, %v1515
        %v1951 = vadd.f32 %v1950, %v1517
        %1952 = vadd.xlane.f32.xlu0 %v1951
        %v1953 = vpop.xlane.xlu0 %1952
        %v1954 = vadd.f32 %v1519, %v1521
        %v1955 = vadd.f32 %v1954, %v1523
        %1956 = vadd.xlane.f32.xlu0 %v1955
        %v1957 = vpop.xlane.xlu0 %1956
        %v1958 = vadd.f32 %v1525, %v1527
        %v1959 = vadd.f32 %v1958, %v1529
        %1960 = vadd.xlane.f32.xlu0 %v1959
        %v1961 = vpop.xlane.xlu0 %1960
        %v1962 = vadd.f32 %v1531, %v1533
        %v1963 = vadd.f32 %v1962, %v1535
        %1964 = vadd.xlane.f32.xlu0 %v1963
        %v1965 = vpop.xlane.xlu0 %1964
        %v1966 = vadd.f32 %v1537, %v1539
        %v1967 = vadd.f32 %v1966, %v1541
        %1968 = vadd.xlane.f32.xlu0 %v1967
        %v1969 = vpop.xlane.xlu0 %1968
        %v1970 = vadd.f32 %v1543, %v1545
        %v1971 = vadd.f32 %v1970, %v1547
        %1972 = vadd.xlane.f32.xlu0 %v1971
        %v1973 = vpop.xlane.xlu0 %1972
        %v1974 = vadd.f32 %v1549, %v1551
        %v1975 = vadd.f32 %v1974, %v1553
        %1976 = vadd.xlane.f32.xlu0 %v1975
        %v1977 = vpop.xlane.xlu0 %1976
        %v1978 = vadd.f32 %v1555, %v1557
        %v1979 = vadd.f32 %v1978, %v1559
        %1980 = vadd.xlane.f32.xlu0 %v1979
        %v1981 = vpop.xlane.xlu0 %1980
        %v1982 = vadd.f32 %v1561, %v1563
        %v1983 = vadd.f32 %v1982, %v1565
        %1984 = vadd.xlane.f32.xlu0 %v1983
        %v1985 = vpop.xlane.xlu0 %1984
        %v1986 = vadd.f32 %v1567, %v1569
        %v1987 = vadd.f32 %v1986, %v1571
        %1988 = vadd.xlane.f32.xlu0 %v1987
        %v1989 = vpop.xlane.xlu0 %1988
        %v1990 = vadd.f32 %v1573, %v1575
        %v1991 = vadd.f32 %v1990, %v1577
        %1992 = vadd.xlane.f32.xlu0 %v1991
        %v1993 = vpop.xlane.xlu0 %1992
        %v1994 = vadd.f32 %v1579, %v1581
        %v1995 = vadd.f32 %v1994, %v1583
        %1996 = vadd.xlane.f32.xlu0 %v1995
        %v1997 = vpop.xlane.xlu0 %1996
        %v1998 = vadd.f32 %v1585, %v1587
        %v1999 = vadd.f32 %v1998, %v1589
        %2000 = vadd.xlane.f32.xlu0 %v1999
        %v2001 = vpop.xlane.xlu0 %2000
        %v2002 = vadd.f32 %v1591, %v1593
        %v2003 = vadd.f32 %v2002, %v1595
        %2004 = vadd.xlane.f32.xlu0 %v2003
        %v2005 = vpop.xlane.xlu0 %2004
        %v2006 = vadd.f32 %v1597, %v1599
        %v2007 = vadd.f32 %v2006, %v1601
        %2008 = vadd.xlane.f32.xlu0 %v2007
        %v2009 = vpop.xlane.xlu0 %2008
        %v2010 = vadd.f32 %v1603, %v1605
        %v2011 = vadd.f32 %v2010, %v1607
        %2012 = vadd.xlane.f32.xlu0 %v2011
        %v2013 = vpop.xlane.xlu0 %2012
        %v2014 = vadd.f32 %v1609, %v1611
        %v2015 = vadd.f32 %v2014, %v1613
        %2016 = vadd.xlane.f32.xlu0 %v2015
        %v2017 = vpop.xlane.xlu0 %2016
        %v2018 = vadd.f32 %v1615, %v1617
        %v2019 = vadd.f32 %v2018, %v1619
        %2020 = vadd.xlane.f32.xlu0 %v2019
        %v2021 = vpop.xlane.xlu0 %2020
        %v2022 = vadd.f32 %v1621, %v1623
        %v2023 = vadd.f32 %v2022, %v1625
        %2024 = vadd.xlane.f32.xlu0 %v2023
        %v2025 = vpop.xlane.xlu0 %2024
        %v2026 = vadd.f32 %v1627, %v1629
        %v2027 = vadd.f32 %v2026, %v1631
        %2028 = vadd.xlane.f32.xlu0 %v2027
        %v2029 = vpop.xlane.xlu0 %2028
        %v2030 = vadd.f32 %v1633, %v1635
        %v2031 = vadd.f32 %v2030, %v1637
        %2032 = vadd.xlane.f32.xlu0 %v2031
        %v2033 = vpop.xlane.xlu0 %2032
        %v2034 = vadd.f32 %v1639, %v1641
        %v2035 = vadd.f32 %v2034, %v1643
        %2036 = vadd.xlane.f32.xlu0 %v2035
        %v2037 = vpop.xlane.xlu0 %2036
        %v2038 = vadd.f32 %v1645, %v1647
        %v2039 = vadd.f32 %v2038, %v1649
        %2040 = vadd.xlane.f32.xlu0 %v2039
        %v2041 = vpop.xlane.xlu0 %2040
        %v2042 = vadd.f32 %v1651, %v1653
        %v2043 = vadd.f32 %v2042, %v1655
        %2044 = vadd.xlane.f32.xlu0 %v2043
        %v2045 = vpop.xlane.xlu0 %2044
        %v2046 = vadd.f32 %v1657, %v1659
        %v2047 = vadd.f32 %v2046, %v1661
        %2048 = vadd.xlane.f32.xlu0 %v2047
        %v2049 = vpop.xlane.xlu0 %2048
        %v2050 = vadd.f32 %v1663, %v1665
        %v2051 = vadd.f32 %v2050, %v1667
        %2052 = vadd.xlane.f32.xlu0 %v2051
        %v2053 = vpop.xlane.xlu0 %2052
        %v2054 = vadd.f32 %v1669, %v1671
        %v2055 = vadd.f32 %v2054, %v1673
        %2056 = vadd.xlane.f32.xlu0 %v2055
        %v2057 = vpop.xlane.xlu0 %2056
        %v2058 = vrcp.pop %v1677
        %v2059 = vrcp.pop %v1681
        %v2060 = vrcp.pop %v1685
        %v2061 = vrcp.pop %v1689
        %v2062 = vrcp.pop %v1693
        %v2063 = vrcp.pop %v1697
        %v2064 = vrcp.pop %v1701
        %v2065 = vrcp.pop %v1705
        %v2066 = vrcp.pop %v1709
        %v2067 = vrcp.pop %v1713
        %v2068 = vrcp.pop %v1717
        %v2069 = vrcp.pop %v1721
        %v2070 = vrcp.pop %v1725
        %v2071 = vrcp.pop %v1729
        %v2072 = vrcp.pop %v1733
        %v2073 = vrcp.pop %v1737
        %v2074 = vrcp.pop %v1741
        %v2075 = vrcp.pop %v1745
        %v2076 = vrcp.pop %v1749
        %v2077 = vrcp.pop %v1753
        %v2078 = vrcp.pop %v1757
        %v2079 = vrcp.pop %v1761
        %v2080 = vrcp.pop %v1765
        %v2081 = vrcp.pop %v1769
        %v2082 = vrcp.pop %v1773
        %v2083 = vrcp.pop %v1777
        %v2084 = vrcp.pop %v1781
        %v2085 = vrcp.pop %v1785
        %v2086 = vrcp.pop %v1789
        %v2087 = vrcp.pop %v1793
        %v2088 = vrcp.pop %v1797
        %v2089 = vrcp.pop %v1801
        %v2090 = vrcp.pop %v1805
        %v2091 = vrcp.pop %v1809
        %v2092 = vrcp.pop %v1813
        %v2093 = vrcp.pop %v1817
        %v2094 = vrcp.pop %v1821
        %v2095 = vrcp.pop %v1825
        %v2096 = vrcp.pop %v1829
        %v2097 = vrcp.pop %v1833
        %v2098 = vrcp.pop %v1837
        %v2099 = vrcp.pop %v1841
        %v2100 = vrcp.pop %v1845
        %v2101 = vrcp.pop %v1849
        %v2102 = vrcp.pop %v1853
        %v2103 = vrcp.pop %v1857
        %v2104 = vrcp.pop %v1861
        %v2105 = vrcp.pop %v1865
        %v2106 = vrcp.pop %v1869
        %v2107 = vrcp.pop %v1873
        %v2108 = vrcp.pop %v1877
        %v2109 = vrcp.pop %v1881
        %v2110 = vrcp.pop %v1885
        %v2111 = vrcp.pop %v1889
        %v2112 = vrcp.pop %v1893
        %v2113 = vrcp.pop %v1897
        %v2114 = vrcp.pop %v1901
        %v2115 = vrcp.pop %v1905
        %v2116 = vrcp.pop %v1909
        %v2117 = vrcp.pop %v1913
        %v2118 = vrcp.pop %v1917
        %v2119 = vrcp.pop %v1921
        %v2120 = vrcp.pop %v1925
        %v2121 = vrcp.pop %v1929
        %v2122 = vrcp.pop %v1933
        %v2123 = vrcp.pop %v1937
        %v2124 = vrcp.pop %v1941
        %v2125 = vrcp.pop %v1945
        %v2126 = vrcp.pop %v1949
        %v2127 = vrcp.pop %v1953
        %v2128 = vrcp.pop %v1957
        %v2129 = vrcp.pop %v1961
        %v2130 = vrcp.pop %v1965
        %v2131 = vrcp.pop %v1969
        %v2132 = vrcp.pop %v1973
        %v2133 = vrcp.pop %v1977
        %v2134 = vrcp.pop %v1981
        %v2135 = vrcp.pop %v1985
        %v2136 = vrcp.pop %v1989
        %v2137 = vrcp.pop %v1993
        %v2138 = vrcp.pop %v1997
        %v2139 = vrcp.pop %v2001
        %v2140 = vrcp.pop %v2005
        %v2141 = vrcp.pop %v2009
        %v2142 = vrcp.pop %v2013
        %v2143 = vrcp.pop %v2017
        %v2144 = vrcp.pop %v2021
        %v2145 = vrcp.pop %v2025
        %v2146 = vrcp.pop %v2029
        %v2147 = vrcp.pop %v2033
        %v2148 = vrcp.pop %v2037
        %v2149 = vrcp.pop %v2041
        %v2150 = vrcp.pop %v2045
        %v2151 = vrcp.pop %v2049
        %v2152 = vrcp.pop %v2053
        %v2153 = vrcp.pop %v2057
        %v2154 = vmul.f32 %v1677, %v2058
        %v2155 = vmul.f32 %v1681, %v2059
        %v2156 = vmul.f32 %v1685, %v2060
        %v2157 = vmul.f32 %v1689, %v2061
        %v2158 = vmul.f32 %v1693, %v2062
        %v2159 = vmul.f32 %v1697, %v2063
        %v2160 = vmul.f32 %v1701, %v2064
        %v2161 = vmul.f32 %v1705, %v2065
        %v2162 = vmul.f32 %v1709, %v2066
        %v2163 = vmul.f32 %v1713, %v2067
        %v2164 = vmul.f32 %v1717, %v2068
        %v2165 = vmul.f32 %v1721, %v2069
        %v2166 = vmul.f32 %v1725, %v2070
        %v2167 = vmul.f32 %v1729, %v2071
        %v2168 = vmul.f32 %v1733, %v2072
        %v2169 = vmul.f32 %v1737, %v2073
        %v2170 = vmul.f32 %v1741, %v2074
        %v2171 = vmul.f32 %v1745, %v2075
        %v2172 = vmul.f32 %v1749, %v2076
        %v2173 = vmul.f32 %v1753, %v2077
        %v2174 = vmul.f32 %v1757, %v2078
        %v2175 = vmul.f32 %v1761, %v2079
        %v2176 = vmul.f32 %v1765, %v2080
        %v2177 = vmul.f32 %v1769, %v2081
        %v2178 = vmul.f32 %v1773, %v2082
        %v2179 = vmul.f32 %v1777, %v2083
        %v2180 = vmul.f32 %v1781, %v2084
        %v2181 = vmul.f32 %v1785, %v2085
        %v2182 = vmul.f32 %v1789, %v2086
        %v2183 = vmul.f32 %v1793, %v2087
        %v2184 = vmul.f32 %v1797, %v2088
        %v2185 = vmul.f32 %v1801, %v2089
        %v2186 = vmul.f32 %v1805, %v2090
        %v2187 = vmul.f32 %v1809, %v2091
        %v2188 = vmul.f32 %v1813, %v2092
        %v2189 = vmul.f32 %v1817, %v2093
        %v2190 = vmul.f32 %v1821, %v2094
        %v2191 = vmul.f32 %v1825, %v2095
        %v2192 = vmul.f32 %v1829, %v2096
        %v2193 = vmul.f32 %v1833, %v2097
        %v2194 = vmul.f32 %v1837, %v2098
        %v2195 = vmul.f32 %v1841, %v2099
        %v2196 = vmul.f32 %v1845, %v2100
        %v2197 = vmul.f32 %v1849, %v2101
        %v2198 = vmul.f32 %v1853, %v2102
        %v2199 = vmul.f32 %v1857, %v2103
        %v2200 = vmul.f32 %v1861, %v2104
        %v2201 = vmul.f32 %v1865, %v2105
        %v2202 = vmul.f32 %v1869, %v2106
        %v2203 = vmul.f32 %v1873, %v2107
        %v2204 = vmul.f32 %v1877, %v2108
        %v2205 = vmul.f32 %v1881, %v2109
        %v2206 = vmul.f32 %v1885, %v2110
        %v2207 = vmul.f32 %v1889, %v2111
        %v2208 = vmul.f32 %v1893, %v2112
        %v2209 = vmul.f32 %v1897, %v2113
        %v2210 = vmul.f32 %v1901, %v2114
        %v2211 = vmul.f32 %v1905, %v2115
        %v2212 = vmul.f32 %v1909, %v2116
        %v2213 = vmul.f32 %v1913, %v2117
        %v2214 = vmul.f32 %v1917, %v2118
        %v2215 = vmul.f32 %v1921, %v2119
        %v2216 = vmul.f32 %v1925, %v2120
        %v2217 = vmul.f32 %v1929, %v2121
        %v2218 = vmul.f32 %v1933, %v2122
        %v2219 = vmul.f32 %v1937, %v2123
        %v2220 = vmul.f32 %v1941, %v2124
        %v2221 = vmul.f32 %v1945, %v2125
        %v2222 = vmul.f32 %v1949, %v2126
        %v2223 = vmul.f32 %v1953, %v2127
        %v2224 = vmul.f32 %v1957, %v2128
        %v2225 = vmul.f32 %v1961, %v2129
        %v2226 = vmul.f32 %v1965, %v2130
        %v2227 = vmul.f32 %v1969, %v2131
        %v2228 = vmul.f32 %v1973, %v2132
        %v2229 = vmul.f32 %v1977, %v2133
        %v2230 = vmul.f32 %v1981, %v2134
        %v2231 = vmul.f32 %v1985, %v2135
        %v2232 = vmul.f32 %v1989, %v2136
        %v2233 = vmul.f32 %v1993, %v2137
        %v2234 = vmul.f32 %v1997, %v2138
        %v2235 = vmul.f32 %v2001, %v2139
        %v2236 = vmul.f32 %v2005, %v2140
        %v2237 = vmul.f32 %v2009, %v2141
        %v2238 = vmul.f32 %v2013, %v2142
        %v2239 = vmul.f32 %v2017, %v2143
        %v2240 = vmul.f32 %v2021, %v2144
        %v2241 = vmul.f32 %v2025, %v2145
        %v2242 = vmul.f32 %v2029, %v2146
        %v2243 = vmul.f32 %v2033, %v2147
        %v2244 = vmul.f32 %v2037, %v2148
        %v2245 = vmul.f32 %v2041, %v2149
        %v2246 = vmul.f32 %v2045, %v2150
        %v2247 = vmul.f32 %v2049, %v2151
        %v2248 = vmul.f32 %v2053, %v2152
        %v2249 = vmul.f32 %v2057, %v2153
        %v2250 = vsub.f32 2.0, %v2154
        %v2251 = vsub.f32 2.0, %v2155
        %v2252 = vsub.f32 2.0, %v2156
        %v2253 = vsub.f32 2.0, %v2157
        %v2254 = vsub.f32 2.0, %v2158
        %v2255 = vsub.f32 2.0, %v2159
        %v2256 = vsub.f32 2.0, %v2160
        %v2257 = vsub.f32 2.0, %v2161
        %v2258 = vsub.f32 2.0, %v2162
        %v2259 = vsub.f32 2.0, %v2163
        %v2260 = vsub.f32 2.0, %v2164
        %v2261 = vsub.f32 2.0, %v2165
        %v2262 = vsub.f32 2.0, %v2166
        %v2263 = vsub.f32 2.0, %v2167
        %v2264 = vsub.f32 2.0, %v2168
        %v2265 = vsub.f32 2.0, %v2169
        %v2266 = vsub.f32 2.0, %v2170
        %v2267 = vsub.f32 2.0, %v2171
        %v2268 = vsub.f32 2.0, %v2172
        %v2269 = vsub.f32 2.0, %v2173
        %v2270 = vsub.f32 2.0, %v2174
        %v2271 = vsub.f32 2.0, %v2175
        %v2272 = vsub.f32 2.0, %v2176
        %v2273 = vsub.f32 2.0, %v2177
        %v2274 = vsub.f32 2.0, %v2178
        %v2275 = vsub.f32 2.0, %v2179
        %v2276 = vsub.f32 2.0, %v2180
        %v2277 = vsub.f32 2.0, %v2181
        %v2278 = vsub.f32 2.0, %v2182
        %v2279 = vsub.f32 2.0, %v2183
        %v2280 = vsub.f32 2.0, %v2184
        %v2281 = vsub.f32 2.0, %v2185
        %v2282 = vsub.f32 2.0, %v2186
        %v2283 = vsub.f32 2.0, %v2187
        %v2284 = vsub.f32 2.0, %v2188
        %v2285 = vsub.f32 2.0, %v2189
        %v2286 = vsub.f32 2.0, %v2190
        %v2287 = vsub.f32 2.0, %v2191
        %v2288 = vsub.f32 2.0, %v2192
        %v2289 = vsub.f32 2.0, %v2193
        %v2290 = vsub.f32 2.0, %v2194
        %v2291 = vsub.f32 2.0, %v2195
        %v2292 = vsub.f32 2.0, %v2196
        %v2293 = vsub.f32 2.0, %v2197
        %v2294 = vsub.f32 2.0, %v2198
        %v2295 = vsub.f32 2.0, %v2199
        %v2296 = vsub.f32 2.0, %v2200
        %v2297 = vsub.f32 2.0, %v2201
        %v2298 = vsub.f32 2.0, %v2202
        %v2299 = vsub.f32 2.0, %v2203
        %v2300 = vsub.f32 2.0, %v2204
        %v2301 = vsub.f32 2.0, %v2205
        %v2302 = vsub.f32 2.0, %v2206
        %v2303 = vsub.f32 2.0, %v2207
        %v2304 = vsub.f32 2.0, %v2208
        %v2305 = vsub.f32 2.0, %v2209
        %v2306 = vsub.f32 2.0, %v2210
        %v2307 = vsub.f32 2.0, %v2211
        %v2308 = vsub.f32 2.0, %v2212
        %v2309 = vsub.f32 2.0, %v2213
        %v2310 = vsub.f32 2.0, %v2214
        %v2311 = vsub.f32 2.0, %v2215
        %v2312 = vsub.f32 2.0, %v2216
        %v2313 = vsub.f32 2.0, %v2217
        %v2314 = vsub.f32 2.0, %v2218
        %v2315 = vsub.f32 2.0, %v2219
        %v2316 = vsub.f32 2.0, %v2220
        %v2317 = vsub.f32 2.0, %v2221
        %v2318 = vsub.f32 2.0, %v2222
        %v2319 = vsub.f32 2.0, %v2223
        %v2320 = vsub.f32 2.0, %v2224
        %v2321 = vsub.f32 2.0, %v2225
        %v2322 = vsub.f32 2.0, %v2226
        %v2323 = vsub.f32 2.0, %v2227
        %v2324 = vsub.f32 2.0, %v2228
        %v2325 = vsub.f32 2.0, %v2229
        %v2326 = vsub.f32 2.0, %v2230
        %v2327 = vsub.f32 2.0, %v2231
        %v2328 = vsub.f32 2.0, %v2232
        %v2329 = vsub.f32 2.0, %v2233
        %v2330 = vsub.f32 2.0, %v2234
        %v2331 = vsub.f32 2.0, %v2235
        %v2332 = vsub.f32 2.0, %v2236
        %v2333 = vsub.f32 2.0, %v2237
        %v2334 = vsub.f32 2.0, %v2238
        %v2335 = vsub.f32 2.0, %v2239
        %v2336 = vsub.f32 2.0, %v2240
        %v2337 = vsub.f32 2.0, %v2241
        %v2338 = vsub.f32 2.0, %v2242
        %v2339 = vsub.f32 2.0, %v2243
        %v2340 = vsub.f32 2.0, %v2244
        %v2341 = vsub.f32 2.0, %v2245
        %v2342 = vsub.f32 2.0, %v2246
        %v2343 = vsub.f32 2.0, %v2247
        %v2344 = vsub.f32 2.0, %v2248
        %v2345 = vsub.f32 2.0, %v2249
        %v2346 = vmul.f32 %v2058, %v2250
        %v2347 = vmul.f32 %v2059, %v2251
        %v2348 = vmul.f32 %v2060, %v2252
        %v2349 = vmul.f32 %v2061, %v2253
        %v2350 = vmul.f32 %v2062, %v2254
        %v2351 = vmul.f32 %v2063, %v2255
        %v2352 = vmul.f32 %v2064, %v2256
        %v2353 = vmul.f32 %v2065, %v2257
        %v2354 = vmul.f32 %v2066, %v2258
        %v2355 = vmul.f32 %v2067, %v2259
        %v2356 = vmul.f32 %v2068, %v2260
        %v2357 = vmul.f32 %v2069, %v2261
        %v2358 = vmul.f32 %v2070, %v2262
        %v2359 = vmul.f32 %v2071, %v2263
        %v2360 = vmul.f32 %v2072, %v2264
        %v2361 = vmul.f32 %v2073, %v2265
        %v2362 = vmul.f32 %v2074, %v2266
        %v2363 = vmul.f32 %v2075, %v2267
        %v2364 = vmul.f32 %v2076, %v2268
        %v2365 = vmul.f32 %v2077, %v2269
        %v2366 = vmul.f32 %v2078, %v2270
        %v2367 = vmul.f32 %v2079, %v2271
        %v2368 = vmul.f32 %v2080, %v2272
        %v2369 = vmul.f32 %v2081, %v2273
        %v2370 = vmul.f32 %v2082, %v2274
        %v2371 = vmul.f32 %v2083, %v2275
        %v2372 = vmul.f32 %v2084, %v2276
        %v2373 = vmul.f32 %v2085, %v2277
        %v2374 = vmul.f32 %v2086, %v2278
        %v2375 = vmul.f32 %v2087, %v2279
        %v2376 = vmul.f32 %v2088, %v2280
        %v2377 = vmul.f32 %v2089, %v2281
        %v2378 = vmul.f32 %v2090, %v2282
        %v2379 = vmul.f32 %v2091, %v2283
        %v2380 = vmul.f32 %v2092, %v2284
        %v2381 = vmul.f32 %v2093, %v2285
        %v2382 = vmul.f32 %v2094, %v2286
        %v2383 = vmul.f32 %v2095, %v2287
        %v2384 = vmul.f32 %v2096, %v2288
        %v2385 = vmul.f32 %v2097, %v2289
        %v2386 = vmul.f32 %v2098, %v2290
        %v2387 = vmul.f32 %v2099, %v2291
        %v2388 = vmul.f32 %v2100, %v2292
        %v2389 = vmul.f32 %v2101, %v2293
        %v2390 = vmul.f32 %v2102, %v2294
        %v2391 = vmul.f32 %v2103, %v2295
        %v2392 = vmul.f32 %v2104, %v2296
        %v2393 = vmul.f32 %v2105, %v2297
        %v2394 = vmul.f32 %v2106, %v2298
        %v2395 = vmul.f32 %v2107, %v2299
        %v2396 = vmul.f32 %v2108, %v2300
        %v2397 = vmul.f32 %v2109, %v2301
        %v2398 = vmul.f32 %v2110, %v2302
        %v2399 = vmul.f32 %v2111, %v2303
        %v2400 = vmul.f32 %v2112, %v2304
        %v2401 = vmul.f32 %v2113, %v2305
        %v2402 = vmul.f32 %v2114, %v2306
        %v2403 = vmul.f32 %v2115, %v2307
        %v2404 = vmul.f32 %v2116, %v2308
        %v2405 = vmul.f32 %v2117, %v2309
        %v2406 = vmul.f32 %v2118, %v2310
        %v2407 = vmul.f32 %v2119, %v2311
        %v2408 = vmul.f32 %v2120, %v2312
        %v2409 = vmul.f32 %v2121, %v2313
        %v2410 = vmul.f32 %v2122, %v2314
        %v2411 = vmul.f32 %v2123, %v2315
        %v2412 = vmul.f32 %v2124, %v2316
        %v2413 = vmul.f32 %v2125, %v2317
        %v2414 = vmul.f32 %v2126, %v2318
        %v2415 = vmul.f32 %v2127, %v2319
        %v2416 = vmul.f32 %v2128, %v2320
        %v2417 = vmul.f32 %v2129, %v2321
        %v2418 = vmul.f32 %v2130, %v2322
        %v2419 = vmul.f32 %v2131, %v2323
        %v2420 = vmul.f32 %v2132, %v2324
        %v2421 = vmul.f32 %v2133, %v2325
        %v2422 = vmul.f32 %v2134, %v2326
        %v2423 = vmul.f32 %v2135, %v2327
        %v2424 = vmul.f32 %v2136, %v2328
        %v2425 = vmul.f32 %v2137, %v2329
        %v2426 = vmul.f32 %v2138, %v2330
        %v2427 = vmul.f32 %v2139, %v2331
        %v2428 = vmul.f32 %v2140, %v2332
        %v2429 = vmul.f32 %v2141, %v2333
        %v2430 = vmul.f32 %v2142, %v2334
        %v2431 = vmul.f32 %v2143, %v2335
        %v2432 = vmul.f32 %v2144, %v2336
        %v2433 = vmul.f32 %v2145, %v2337
        %v2434 = vmul.f32 %v2146, %v2338
        %v2435 = vmul.f32 %v2147, %v2339
        %v2436 = vmul.f32 %v2148, %v2340
        %v2437 = vmul.f32 %v2149, %v2341
        %v2438 = vmul.f32 %v2150, %v2342
        %v2439 = vmul.f32 %v2151, %v2343
        %v2440 = vmul.f32 %v2152, %v2344
        %v2441 = vmul.f32 %v2153, %v2345
        %v2442 = vmul.f32 %v1099, %v2346
        %v2443 = vmul.f32 %v1101, %v2346
        %v2444 = vmul.f32 %v1103, %v2346
        %v2445 = vmul.f32 %v1105, %v2347
        %v2446 = vmul.f32 %v1107, %v2347
        %v2447 = vmul.f32 %v1109, %v2347
        %v2448 = vmul.f32 %v1111, %v2348
        %v2449 = vmul.f32 %v1113, %v2348
        %v2450 = vmul.f32 %v1115, %v2348
        %v2451 = vmul.f32 %v1117, %v2349
        %v2452 = vmul.f32 %v1119, %v2349
        %v2453 = vmul.f32 %v1121, %v2349
        %v2454 = vmul.f32 %v1123, %v2350
        %v2455 = vmul.f32 %v1125, %v2350
        %v2456 = vmul.f32 %v1127, %v2350
        %v2457 = vmul.f32 %v1129, %v2351
        %v2458 = vmul.f32 %v1131, %v2351
        %v2459 = vmul.f32 %v1133, %v2351
        %v2460 = vmul.f32 %v1135, %v2352
        %v2461 = vmul.f32 %v1137, %v2352
        %v2462 = vmul.f32 %v1139, %v2352
        %v2463 = vmul.f32 %v1141, %v2353
        %v2464 = vmul.f32 %v1143, %v2353
        %v2465 = vmul.f32 %v1145, %v2353
        %v2466 = vmul.f32 %v1147, %v2354
        %v2467 = vmul.f32 %v1149, %v2354
        %v2468 = vmul.f32 %v1151, %v2354
        %v2469 = vmul.f32 %v1153, %v2355
        %v2470 = vmul.f32 %v1155, %v2355
        %v2471 = vmul.f32 %v1157, %v2355
        %v2472 = vmul.f32 %v1159, %v2356
        %v2473 = vmul.f32 %v1161, %v2356
        %v2474 = vmul.f32 %v1163, %v2356
        %v2475 = vmul.f32 %v1165, %v2357
        %v2476 = vmul.f32 %v1167, %v2357
        %v2477 = vmul.f32 %v1169, %v2357
        %v2478 = vmul.f32 %v1171, %v2358
        %v2479 = vmul.f32 %v1173, %v2358
        %v2480 = vmul.f32 %v1175, %v2358
        %v2481 = vmul.f32 %v1177, %v2359
        %v2482 = vmul.f32 %v1179, %v2359
        %v2483 = vmul.f32 %v1181, %v2359
        %v2484 = vmul.f32 %v1183, %v2360
        %v2485 = vmul.f32 %v1185, %v2360
        %v2486 = vmul.f32 %v1187, %v2360
        %v2487 = vmul.f32 %v1189, %v2361
        %v2488 = vmul.f32 %v1191, %v2361
        %v2489 = vmul.f32 %v1193, %v2361
        %v2490 = vmul.f32 %v1195, %v2362
        %v2491 = vmul.f32 %v1197, %v2362
        %v2492 = vmul.f32 %v1199, %v2362
        %v2493 = vmul.f32 %v1201, %v2363
        %v2494 = vmul.f32 %v1203, %v2363
        %v2495 = vmul.f32 %v1205, %v2363
        %v2496 = vmul.f32 %v1207, %v2364
        %v2497 = vmul.f32 %v1209, %v2364
        %v2498 = vmul.f32 %v1211, %v2364
        %v2499 = vmul.f32 %v1213, %v2365
        %v2500 = vmul.f32 %v1215, %v2365
        %v2501 = vmul.f32 %v1217, %v2365
        %v2502 = vmul.f32 %v1219, %v2366
        %v2503 = vmul.f32 %v1221, %v2366
        %v2504 = vmul.f32 %v1223, %v2366
        %v2505 = vmul.f32 %v1225, %v2367
        %v2506 = vmul.f32 %v1227, %v2367
        %v2507 = vmul.f32 %v1229, %v2367
        %v2508 = vmul.f32 %v1231, %v2368
        %v2509 = vmul.f32 %v1233, %v2368
        %v2510 = vmul.f32 %v1235, %v2368
        %v2511 = vmul.f32 %v1237, %v2369
        %v2512 = vmul.f32 %v1239, %v2369
        %v2513 = vmul.f32 %v1241, %v2369
        %v2514 = vmul.f32 %v1243, %v2370
        %v2515 = vmul.f32 %v1245, %v2370
        %v2516 = vmul.f32 %v1247, %v2370
        %v2517 = vmul.f32 %v1249, %v2371
        %v2518 = vmul.f32 %v1251, %v2371
        %v2519 = vmul.f32 %v1253, %v2371
        %v2520 = vmul.f32 %v1255, %v2372
        %v2521 = vmul.f32 %v1257, %v2372
        %v2522 = vmul.f32 %v1259, %v2372
        %v2523 = vmul.f32 %v1261, %v2373
        %v2524 = vmul.f32 %v1263, %v2373
        %v2525 = vmul.f32 %v1265, %v2373
        %v2526 = vmul.f32 %v1267, %v2374
        %v2527 = vmul.f32 %v1269, %v2374
        %v2528 = vmul.f32 %v1271, %v2374
        %v2529 = vmul.f32 %v1273, %v2375
        %v2530 = vmul.f32 %v1275, %v2375
        %v2531 = vmul.f32 %v1277, %v2375
        %v2532 = vmul.f32 %v1279, %v2376
        %v2533 = vmul.f32 %v1281, %v2376
        %v2534 = vmul.f32 %v1283, %v2376
        %v2535 = vmul.f32 %v1285, %v2377
        %v2536 = vmul.f32 %v1287, %v2377
        %v2537 = vmul.f32 %v1289, %v2377
        %v2538 = vmul.f32 %v1291, %v2378
        %v2539 = vmul.f32 %v1293, %v2378
        %v2540 = vmul.f32 %v1295, %v2378
        %v2541 = vmul.f32 %v1297, %v2379
        %v2542 = vmul.f32 %v1299, %v2379
        %v2543 = vmul.f32 %v1301, %v2379
        %v2544 = vmul.f32 %v1303, %v2380
        %v2545 = vmul.f32 %v1305, %v2380
        %v2546 = vmul.f32 %v1307, %v2380
        %v2547 = vmul.f32 %v1309, %v2381
        %v2548 = vmul.f32 %v1311, %v2381
        %v2549 = vmul.f32 %v1313, %v2381
        %v2550 = vmul.f32 %v1315, %v2382
        %v2551 = vmul.f32 %v1317, %v2382
        %v2552 = vmul.f32 %v1319, %v2382
        %v2553 = vmul.f32 %v1321, %v2383
        %v2554 = vmul.f32 %v1323, %v2383
        %v2555 = vmul.f32 %v1325, %v2383
        %v2556 = vmul.f32 %v1327, %v2384
        %v2557 = vmul.f32 %v1329, %v2384
        %v2558 = vmul.f32 %v1331, %v2384
        %v2559 = vmul.f32 %v1333, %v2385
        %v2560 = vmul.f32 %v1335, %v2385
        %v2561 = vmul.f32 %v1337, %v2385
        %v2562 = vmul.f32 %v1339, %v2386
        %v2563 = vmul.f32 %v1341, %v2386
        %v2564 = vmul.f32 %v1343, %v2386
        %v2565 = vmul.f32 %v1345, %v2387
        %v2566 = vmul.f32 %v1347, %v2387
        %v2567 = vmul.f32 %v1349, %v2387
        %v2568 = vmul.f32 %v1351, %v2388
        %v2569 = vmul.f32 %v1353, %v2388
        %v2570 = vmul.f32 %v1355, %v2388
        %v2571 = vmul.f32 %v1357, %v2389
        %v2572 = vmul.f32 %v1359, %v2389
        %v2573 = vmul.f32 %v1361, %v2389
        %v2574 = vmul.f32 %v1363, %v2390
        %v2575 = vmul.f32 %v1365, %v2390
        %v2576 = vmul.f32 %v1367, %v2390
        %v2577 = vmul.f32 %v1369, %v2391
        %v2578 = vmul.f32 %v1371, %v2391
        %v2579 = vmul.f32 %v1373, %v2391
        %v2580 = vmul.f32 %v1375, %v2392
        %v2581 = vmul.f32 %v1377, %v2392
        %v2582 = vmul.f32 %v1379, %v2392
        %v2583 = vmul.f32 %v1381, %v2393
        %v2584 = vmul.f32 %v1383, %v2393
        %v2585 = vmul.f32 %v1385, %v2393
        %v2586 = vmul.f32 %v1387, %v2394
        %v2587 = vmul.f32 %v1389, %v2394
        %v2588 = vmul.f32 %v1391, %v2394
        %v2589 = vmul.f32 %v1393, %v2395
        %v2590 = vmul.f32 %v1395, %v2395
        %v2591 = vmul.f32 %v1397, %v2395
        %v2592 = vmul.f32 %v1399, %v2396
        %v2593 = vmul.f32 %v1401, %v2396
        %v2594 = vmul.f32 %v1403, %v2396
        %v2595 = vmul.f32 %v1405, %v2397
        %v2596 = vmul.f32 %v1407, %v2397
        %v2597 = vmul.f32 %v1409, %v2397
        %v2598 = vmul.f32 %v1411, %v2398
        %v2599 = vmul.f32 %v1413, %v2398
        %v2600 = vmul.f32 %v1415, %v2398
        %v2601 = vmul.f32 %v1417, %v2399
        %v2602 = vmul.f32 %v1419, %v2399
        %v2603 = vmul.f32 %v1421, %v2399
        %v2604 = vmul.f32 %v1423, %v2400
        %v2605 = vmul.f32 %v1425, %v2400
        %v2606 = vmul.f32 %v1427, %v2400
        %v2607 = vmul.f32 %v1429, %v2401
        %v2608 = vmul.f32 %v1431, %v2401
        %v2609 = vmul.f32 %v1433, %v2401
        %v2610 = vmul.f32 %v1435, %v2402
        %v2611 = vmul.f32 %v1437, %v2402
        %v2612 = vmul.f32 %v1439, %v2402
        %v2613 = vmul.f32 %v1441, %v2403
        %v2614 = vmul.f32 %v1443, %v2403
        %v2615 = vmul.f32 %v1445, %v2403
        %v2616 = vmul.f32 %v1447, %v2404
        %v2617 = vmul.f32 %v1449, %v2404
        %v2618 = vmul.f32 %v1451, %v2404
        %v2619 = vmul.f32 %v1453, %v2405
        %v2620 = vmul.f32 %v1455, %v2405
        %v2621 = vmul.f32 %v1457, %v2405
        %v2622 = vmul.f32 %v1459, %v2406
        %v2623 = vmul.f32 %v1461, %v2406
        %v2624 = vmul.f32 %v1463, %v2406
        %v2625 = vmul.f32 %v1465, %v2407
        %v2626 = vmul.f32 %v1467, %v2407
        %v2627 = vmul.f32 %v1469, %v2407
        %v2628 = vmul.f32 %v1471, %v2408
        %v2629 = vmul.f32 %v1473, %v2408
        %v2630 = vmul.f32 %v1475, %v2408
        %v2631 = vmul.f32 %v1477, %v2409
        %v2632 = vmul.f32 %v1479, %v2409
        %v2633 = vmul.f32 %v1481, %v2409
        %v2634 = vmul.f32 %v1483, %v2410
        %v2635 = vmul.f32 %v1485, %v2410
        %v2636 = vmul.f32 %v1487, %v2410
        %v2637 = vmul.f32 %v1489, %v2411
        %v2638 = vmul.f32 %v1491, %v2411
        %v2639 = vmul.f32 %v1493, %v2411
        %v2640 = vmul.f32 %v1495, %v2412
        %v2641 = vmul.f32 %v1497, %v2412
        %v2642 = vmul.f32 %v1499, %v2412
        %v2643 = vmul.f32 %v1501, %v2413
        %v2644 = vmul.f32 %v1503, %v2413
        %v2645 = vmul.f32 %v1505, %v2413
        %v2646 = vmul.f32 %v1507, %v2414
        %v2647 = vmul.f32 %v1509, %v2414
        %v2648 = vmul.f32 %v1511, %v2414
        %v2649 = vmul.f32 %v1513, %v2415
        %v2650 = vmul.f32 %v1515, %v2415
        %v2651 = vmul.f32 %v1517, %v2415
        %v2652 = vmul.f32 %v1519, %v2416
        %v2653 = vmul.f32 %v1521, %v2416
        %v2654 = vmul.f32 %v1523, %v2416
        %v2655 = vmul.f32 %v1525, %v2417
        %v2656 = vmul.f32 %v1527, %v2417
        %v2657 = vmul.f32 %v1529, %v2417
        %v2658 = vmul.f32 %v1531, %v2418
        %v2659 = vmul.f32 %v1533, %v2418
        %v2660 = vmul.f32 %v1535, %v2418
        %v2661 = vmul.f32 %v1537, %v2419
        %v2662 = vmul.f32 %v1539, %v2419
        %v2663 = vmul.f32 %v1541, %v2419
        %v2664 = vmul.f32 %v1543, %v2420
        %v2665 = vmul.f32 %v1545, %v2420
        %v2666 = vmul.f32 %v1547, %v2420
        %v2667 = vmul.f32 %v1549, %v2421
        %v2668 = vmul.f32 %v1551, %v2421
        %v2669 = vmul.f32 %v1553, %v2421
        %v2670 = vmul.f32 %v1555, %v2422
        %v2671 = vmul.f32 %v1557, %v2422
        %v2672 = vmul.f32 %v1559, %v2422
        %v2673 = vmul.f32 %v1561, %v2423
        %v2674 = vmul.f32 %v1563, %v2423
        %v2675 = vmul.f32 %v1565, %v2423
        %v2676 = vmul.f32 %v1567, %v2424
        %v2677 = vmul.f32 %v1569, %v2424
        %v2678 = vmul.f32 %v1571, %v2424
        %v2679 = vmul.f32 %v1573, %v2425
        %v2680 = vmul.f32 %v1575, %v2425
        %v2681 = vmul.f32 %v1577, %v2425
        %v2682 = vmul.f32 %v1579, %v2426
        %v2683 = vmul.f32 %v1581, %v2426
        %v2684 = vmul.f32 %v1583, %v2426
        %v2685 = vmul.f32 %v1585, %v2427
        %v2686 = vmul.f32 %v1587, %v2427
        %v2687 = vmul.f32 %v1589, %v2427
        %v2688 = vmul.f32 %v1591, %v2428
        %v2689 = vmul.f32 %v1593, %v2428
        %v2690 = vmul.f32 %v1595, %v2428
        %v2691 = vmul.f32 %v1597, %v2429
        %v2692 = vmul.f32 %v1599, %v2429
        %v2693 = vmul.f32 %v1601, %v2429
        %v2694 = vmul.f32 %v1603, %v2430
        %v2695 = vmul.f32 %v1605, %v2430
        %v2696 = vmul.f32 %v1607, %v2430
        %v2697 = vmul.f32 %v1609, %v2431
        %v2698 = vmul.f32 %v1611, %v2431
        %v2699 = vmul.f32 %v1613, %v2431
        %v2700 = vmul.f32 %v1615, %v2432
        %v2701 = vmul.f32 %v1617, %v2432
        %v2702 = vmul.f32 %v1619, %v2432
        %v2703 = vmul.f32 %v1621, %v2433
        %v2704 = vmul.f32 %v1623, %v2433
        %v2705 = vmul.f32 %v1625, %v2433
        %v2706 = vmul.f32 %v1627, %v2434
        %v2707 = vmul.f32 %v1629, %v2434
        %v2708 = vmul.f32 %v1631, %v2434
        %v2709 = vmul.f32 %v1633, %v2435
        %v2710 = vmul.f32 %v1635, %v2435
        %v2711 = vmul.f32 %v1637, %v2435
        %v2712 = vmul.f32 %v1639, %v2436
        %v2713 = vmul.f32 %v1641, %v2436
        %v2714 = vmul.f32 %v1643, %v2436
        %v2715 = vmul.f32 %v1645, %v2437
        %v2716 = vmul.f32 %v1647, %v2437
        %v2717 = vmul.f32 %v1649, %v2437
        %v2718 = vmul.f32 %v1651, %v2438
        %v2719 = vmul.f32 %v1653, %v2438
        %v2720 = vmul.f32 %v1655, %v2438
        %v2721 = vmul.f32 %v1657, %v2439
        %v2722 = vmul.f32 %v1659, %v2439
        %v2723 = vmul.f32 %v1661, %v2439
        %v2724 = vmul.f32 %v1663, %v2440
        %v2725 = vmul.f32 %v1665, %v2440
        %v2726 = vmul.f32 %v1667, %v2440
        %v2727 = vmul.f32 %v1669, %v2441
        %v2728 = vmul.f32 %v1671, %v2441
        %v2729 = vmul.f32 %v1673, %v2441
        %2730 = vst [vmem:[%s135] sm:$0xff] %v2442
        %2731 = vst [vmem:[%s135 + $0x8] sm:$0xff] %v2443
        %2732 = vst [vmem:[%s135 + $0x10] sm:$0xff] %v2444
        %2733 = vst [vmem:[%s135 + $0x18] sm:$0xff] %v2445
        %2734 = vst [vmem:[%s135 + $0x20] sm:$0xff] %v2446
        %2735 = vst [vmem:[%s135 + $0x28] sm:$0xff] %v2447
        %2736 = vst [vmem:[%s135 + $0x30] sm:$0xff] %v2448
        %2737 = vst [vmem:[%s135 + $0x38] sm:$0xff] %v2449
        %2738 = vst [vmem:[%s135 + $0x40] sm:$0xff] %v2450
        %2739 = vst [vmem:[%s135 + $0x48] sm:$0xff] %v2451
        %2740 = vst [vmem:[%s135 + $0x50] sm:$0xff] %v2452
        %2741 = vst [vmem:[%s135 + $0x58] sm:$0xff] %v2453
        %2742 = vst [vmem:[%s135 + $0x60] sm:$0xff] %v2454
        %2743 = vst [vmem:[%s135 + $0x68] sm:$0xff] %v2455
        %2744 = vst [vmem:[%s135 + $0x70] sm:$0xff] %v2456
        %2745 = vst [vmem:[%s135 + $0x78] sm:$0xff] %v2457
        %2746 = vst [vmem:[%s135 + $0x80] sm:$0xff] %v2458
        %2747 = vst [vmem:[%s135 + $0x88] sm:$0xff] %v2459
        %2748 = vst [vmem:[%s135 + $0x90] sm:$0xff] %v2460
        %2749 = vst [vmem:[%s135 + $0x98] sm:$0xff] %v2461
        %2750 = vst [vmem:[%s135 + $0xa0] sm:$0xff] %v2462
        %2751 = vst [vmem:[%s135 + $0xa8] sm:$0xff] %v2463
        %2752 = vst [vmem:[%s135 + $0xb0] sm:$0xff] %v2464
        %2753 = vst [vmem:[%s135 + $0xb8] sm:$0xff] %v2465
        %2754 = vst [vmem:[%s135 + $0xc0] sm:$0xff] %v2466
        %2755 = vst [vmem:[%s135 + $0xc8] sm:$0xff] %v2467
        %2756 = vst [vmem:[%s135 + $0xd0] sm:$0xff] %v2468
        %2757 = vst [vmem:[%s135 + $0xd8] sm:$0xff] %v2469
        %2758 = vst [vmem:[%s135 + $0xe0] sm:$0xff] %v2470
        %2759 = vst [vmem:[%s135 + $0xe8] sm:$0xff] %v2471
        %2760 = vst [vmem:[%s135 + $0xf0] sm:$0xff] %v2472
        %2761 = vst [vmem:[%s135 + $0xf8] sm:$0xff] %v2473
        %2762 = vst [vmem:[%s135 + $0x100] sm:$0xff] %v2474
        %2763 = vst [vmem:[%s135 + $0x108] sm:$0xff] %v2475
        %2764 = vst [vmem:[%s135 + $0x110] sm:$0xff] %v2476
        %2765 = vst [vmem:[%s135 + $0x118] sm:$0xff] %v2477
        %2766 = vst [vmem:[%s135 + $0x120] sm:$0xff] %v2478
        %2767 = vst [vmem:[%s135 + $0x128] sm:$0xff] %v2479
        %2768 = vst [vmem:[%s135 + $0x130] sm:$0xff] %v2480
        %2769 = vst [vmem:[%s135 + $0x138] sm:$0xff] %v2481
        %2770 = vst [vmem:[%s135 + $0x140] sm:$0xff] %v2482
        %2771 = vst [vmem:[%s135 + $0x148] sm:$0xff] %v2483
        %2772 = vst [vmem:[%s135 + $0x150] sm:$0xff] %v2484
        %2773 = vst [vmem:[%s135 + $0x158] sm:$0xff] %v2485
        %2774 = vst [vmem:[%s135 + $0x160] sm:$0xff] %v2486
        %2775 = vst [vmem:[%s135 + $0x168] sm:$0xff] %v2487
        %2776 = vst [vmem:[%s135 + $0x170] sm:$0xff] %v2488
        %2777 = vst [vmem:[%s135 + $0x178] sm:$0xff] %v2489
        %2778 = vst [vmem:[%s135 + $0x180] sm:$0xff] %v2490
        %2779 = vst [vmem:[%s135 + $0x188] sm:$0xff] %v2491
        %2780 = vst [vmem:[%s135 + $0x190] sm:$0xff] %v2492
        %2781 = vst [vmem:[%s135 + $0x198] sm:$0xff] %v2493
        %2782 = vst [vmem:[%s135 + $0x1a0] sm:$0xff] %v2494
        %2783 = vst [vmem:[%s135 + $0x1a8] sm:$0xff] %v2495
        %2784 = vst [vmem:[%s135 + $0x1b0] sm:$0xff] %v2496
        %2785 = vst [vmem:[%s135 + $0x1b8] sm:$0xff] %v2497
        %2786 = vst [vmem:[%s135 + $0x1c0] sm:$0xff] %v2498
        %2787 = vst [vmem:[%s135 + $0x1c8] sm:$0xff] %v2499
        %2788 = vst [vmem:[%s135 + $0x1d0] sm:$0xff] %v2500
        %2789 = vst [vmem:[%s135 + $0x1d8] sm:$0xff] %v2501
        %2790 = vst [vmem:[%s135 + $0x1e0] sm:$0xff] %v2502
        %2791 = vst [vmem:[%s135 + $0x1e8] sm:$0xff] %v2503
        %2792 = vst [vmem:[%s135 + $0x1f0] sm:$0xff] %v2504
        %2793 = vst [vmem:[%s135 + $0x1f8] sm:$0xff] %v2505
        %2794 = vst [vmem:[%s135 + $0x200] sm:$0xff] %v2506
        %2795 = vst [vmem:[%s135 + $0x208] sm:$0xff] %v2507
        %2796 = vst [vmem:[%s135 + $0x210] sm:$0xff] %v2508
        %2797 = vst [vmem:[%s135 + $0x218] sm:$0xff] %v2509
        %2798 = vst [vmem:[%s135 + $0x220] sm:$0xff] %v2510
        %2799 = vst [vmem:[%s135 + $0x228] sm:$0xff] %v2511
        %2800 = vst [vmem:[%s135 + $0x230] sm:$0xff] %v2512
        %2801 = vst [vmem:[%s135 + $0x238] sm:$0xff] %v2513
        %2802 = vst [vmem:[%s135 + $0x240] sm:$0xff] %v2514
        %2803 = vst [vmem:[%s135 + $0x248] sm:$0xff] %v2515
        %2804 = vst [vmem:[%s135 + $0x250] sm:$0xff] %v2516
        %2805 = vst [vmem:[%s135 + $0x258] sm:$0xff] %v2517
        %2806 = vst [vmem:[%s135 + $0x260] sm:$0xff] %v2518
        %2807 = vst [vmem:[%s135 + $0x268] sm:$0xff] %v2519
        %2808 = vst [vmem:[%s135 + $0x270] sm:$0xff] %v2520
        %2809 = vst [vmem:[%s135 + $0x278] sm:$0xff] %v2521
        %2810 = vst [vmem:[%s135 + $0x280] sm:$0xff] %v2522
        %2811 = vst [vmem:[%s135 + $0x288] sm:$0xff] %v2523
        %2812 = vst [vmem:[%s135 + $0x290] sm:$0xff] %v2524
        %2813 = vst [vmem:[%s135 + $0x298] sm:$0xff] %v2525
        %2814 = vst [vmem:[%s135 + $0x2a0] sm:$0xff] %v2526
        %2815 = vst [vmem:[%s135 + $0x2a8] sm:$0xff] %v2527
        %2816 = vst [vmem:[%s135 + $0x2b0] sm:$0xff] %v2528
        %2817 = vst [vmem:[%s135 + $0x2b8] sm:$0xff] %v2529
        %2818 = vst [vmem:[%s135 + $0x2c0] sm:$0xff] %v2530
        %2819 = vst [vmem:[%s135 + $0x2c8] sm:$0xff] %v2531
        %2820 = vst [vmem:[%s135 + $0x2d0] sm:$0xff] %v2532
        %2821 = vst [vmem:[%s135 + $0x2d8] sm:$0xff] %v2533
        %2822 = vst [vmem:[%s135 + $0x2e0] sm:$0xff] %v2534
        %2823 = vst [vmem:[%s135 + $0x2e8] sm:$0xff] %v2535
        %2824 = vst [vmem:[%s135 + $0x2f0] sm:$0xff] %v2536
        %2825 = vst [vmem:[%s135 + $0x2f8] sm:$0xff] %v2537
        %2826 = vst [vmem:[%s135 + $0x300] sm:$0xff] %v2538
        %2827 = vst [vmem:[%s135 + $0x308] sm:$0xff] %v2539
        %2828 = vst [vmem:[%s135 + $0x310] sm:$0xff] %v2540
        %2829 = vst [vmem:[%s135 + $0x318] sm:$0xff] %v2541
        %2830 = vst [vmem:[%s135 + $0x320] sm:$0xff] %v2542
        %2831 = vst [vmem:[%s135 + $0x328] sm:$0xff] %v2543
        %2832 = vst [vmem:[%s135 + $0x330] sm:$0xff] %v2544
        %2833 = vst [vmem:[%s135 + $0x338] sm:$0xff] %v2545
        %2834 = vst [vmem:[%s135 + $0x340] sm:$0xff] %v2546
        %2835 = vst [vmem:[%s135 + $0x348] sm:$0xff] %v2547
        %2836 = vst [vmem:[%s135 + $0x350] sm:$0xff] %v2548
        %2837 = vst [vmem:[%s135 + $0x358] sm:$0xff] %v2549
        %2838 = vst [vmem:[%s135 + $0x360] sm:$0xff] %v2550
        %2839 = vst [vmem:[%s135 + $0x368] sm:$0xff] %v2551
        %2840 = vst [vmem:[%s135 + $0x370] sm:$0xff] %v2552
        %2841 = vst [vmem:[%s135 + $0x378] sm:$0xff] %v2553
        %2842 = vst [vmem:[%s135 + $0x380] sm:$0xff] %v2554
        %2843 = vst [vmem:[%s135 + $0x388] sm:$0xff] %v2555
        %2844 = vst [vmem:[%s135 + $0x390] sm:$0xff] %v2556
        %2845 = vst [vmem:[%s135 + $0x398] sm:$0xff] %v2557
        %2846 = vst [vmem:[%s135 + $0x3a0] sm:$0xff] %v2558
        %2847 = vst [vmem:[%s135 + $0x3a8] sm:$0xff] %v2559
        %2848 = vst [vmem:[%s135 + $0x3b0] sm:$0xff] %v2560
        %2849 = vst [vmem:[%s135 + $0x3b8] sm:$0xff] %v2561
        %2850 = vst [vmem:[%s135 + $0x3c0] sm:$0xff] %v2562
        %2851 = vst [vmem:[%s135 + $0x3c8] sm:$0xff] %v2563
        %2852 = vst [vmem:[%s135 + $0x3d0] sm:$0xff] %v2564
        %2853 = vst [vmem:[%s135 + $0x3d8] sm:$0xff] %v2565
        %2854 = vst [vmem:[%s135 + $0x3e0] sm:$0xff] %v2566
        %2855 = vst [vmem:[%s135 + $0x3e8] sm:$0xff] %v2567
        %2856 = vst [vmem:[%s135 + $0x3f0] sm:$0xff] %v2568
        %2857 = vst [vmem:[%s135 + $0x3f8] sm:$0xff] %v2569
        %2858 = vst [vmem:[%s135 + $0x400] sm:$0xff] %v2570
        %2859 = vst [vmem:[%s135 + $0x408] sm:$0xff] %v2571
        %2860 = vst [vmem:[%s135 + $0x410] sm:$0xff] %v2572
        %2861 = vst [vmem:[%s135 + $0x418] sm:$0xff] %v2573
        %2862 = vst [vmem:[%s135 + $0x420] sm:$0xff] %v2574
        %2863 = vst [vmem:[%s135 + $0x428] sm:$0xff] %v2575
        %2864 = vst [vmem:[%s135 + $0x430] sm:$0xff] %v2576
        %2865 = vst [vmem:[%s135 + $0x438] sm:$0xff] %v2577
        %2866 = vst [vmem:[%s135 + $0x440] sm:$0xff] %v2578
        %2867 = vst [vmem:[%s135 + $0x448] sm:$0xff] %v2579
        %2868 = vst [vmem:[%s135 + $0x450] sm:$0xff] %v2580
        %2869 = vst [vmem:[%s135 + $0x458] sm:$0xff] %v2581
        %2870 = vst [vmem:[%s135 + $0x460] sm:$0xff] %v2582
        %2871 = vst [vmem:[%s135 + $0x468] sm:$0xff] %v2583
        %2872 = vst [vmem:[%s135 + $0x470] sm:$0xff] %v2584
        %2873 = vst [vmem:[%s135 + $0x478] sm:$0xff] %v2585
        %2874 = vst [vmem:[%s135 + $0x480] sm:$0xff] %v2586
        %2875 = vst [vmem:[%s135 + $0x488] sm:$0xff] %v2587
        %2876 = vst [vmem:[%s135 + $0x490] sm:$0xff] %v2588
        %2877 = vst [vmem:[%s135 + $0x498] sm:$0xff] %v2589
        %2878 = vst [vmem:[%s135 + $0x4a0] sm:$0xff] %v2590
        %2879 = vst [vmem:[%s135 + $0x4a8] sm:$0xff] %v2591
        %2880 = vst [vmem:[%s135 + $0x4b0] sm:$0xff] %v2592
        %2881 = vst [vmem:[%s135 + $0x4b8] sm:$0xff] %v2593
        %2882 = vst [vmem:[%s135 + $0x4c0] sm:$0xff] %v2594
        %2883 = vst [vmem:[%s135 + $0x4c8] sm:$0xff] %v2595
        %2884 = vst [vmem:[%s135 + $0x4d0] sm:$0xff] %v2596
        %2885 = vst [vmem:[%s135 + $0x4d8] sm:$0xff] %v2597
        %2886 = vst [vmem:[%s135 + $0x4e0] sm:$0xff] %v2598
        %2887 = vst [vmem:[%s135 + $0x4e8] sm:$0xff] %v2599
        %2888 = vst [vmem:[%s135 + $0x4f0] sm:$0xff] %v2600
        %2889 = vst [vmem:[%s135 + $0x4f8] sm:$0xff] %v2601
        %2890 = vst [vmem:[%s135 + $0x500] sm:$0xff] %v2602
        %2891 = vst [vmem:[%s135 + $0x508] sm:$0xff] %v2603
        %2892 = vst [vmem:[%s135 + $0x510] sm:$0xff] %v2604
        %2893 = vst [vmem:[%s135 + $0x518] sm:$0xff] %v2605
        %2894 = vst [vmem:[%s135 + $0x520] sm:$0xff] %v2606
        %2895 = vst [vmem:[%s135 + $0x528] sm:$0xff] %v2607
        %2896 = vst [vmem:[%s135 + $0x530] sm:$0xff] %v2608
        %2897 = vst [vmem:[%s135 + $0x538] sm:$0xff] %v2609
        %2898 = vst [vmem:[%s135 + $0x540] sm:$0xff] %v2610
        %2899 = vst [vmem:[%s135 + $0x548] sm:$0xff] %v2611
        %2900 = vst [vmem:[%s135 + $0x550] sm:$0xff] %v2612
        %2901 = vst [vmem:[%s135 + $0x558] sm:$0xff] %v2613
        %2902 = vst [vmem:[%s135 + $0x560] sm:$0xff] %v2614
        %2903 = vst [vmem:[%s135 + $0x568] sm:$0xff] %v2615
        %2904 = vst [vmem:[%s135 + $0x570] sm:$0xff] %v2616
        %2905 = vst [vmem:[%s135 + $0x578] sm:$0xff] %v2617
        %2906 = vst [vmem:[%s135 + $0x580] sm:$0xff] %v2618
        %2907 = vst [vmem:[%s135 + $0x588] sm:$0xff] %v2619
        %2908 = vst [vmem:[%s135 + $0x590] sm:$0xff] %v2620
        %2909 = vst [vmem:[%s135 + $0x598] sm:$0xff] %v2621
        %2910 = vst [vmem:[%s135 + $0x5a0] sm:$0xff] %v2622
        %2911 = vst [vmem:[%s135 + $0x5a8] sm:$0xff] %v2623
        %2912 = vst [vmem:[%s135 + $0x5b0] sm:$0xff] %v2624
        %2913 = vst [vmem:[%s135 + $0x5b8] sm:$0xff] %v2625
        %2914 = vst [vmem:[%s135 + $0x5c0] sm:$0xff] %v2626
        %2915 = vst [vmem:[%s135 + $0x5c8] sm:$0xff] %v2627
        %2916 = vst [vmem:[%s135 + $0x5d0] sm:$0xff] %v2628
        %2917 = vst [vmem:[%s135 + $0x5d8] sm:$0xff] %v2629
        %2918 = vst [vmem:[%s135 + $0x5e0] sm:$0xff] %v2630
        %2919 = vst [vmem:[%s135 + $0x5e8] sm:$0xff] %v2631
        %2920 = vst [vmem:[%s135 + $0x5f0] sm:$0xff] %v2632
        %2921 = vst [vmem:[%s135 + $0x5f8] sm:$0xff] %v2633
        %2922 = vst [vmem:[%s135 + $0x600] sm:$0xff] %v2634
        %2923 = vst [vmem:[%s135 + $0x608] sm:$0xff] %v2635
        %2924 = vst [vmem:[%s135 + $0x610] sm:$0xff] %v2636
        %2925 = vst [vmem:[%s135 + $0x618] sm:$0xff] %v2637
        %2926 = vst [vmem:[%s135 + $0x620] sm:$0xff] %v2638
        %2927 = vst [vmem:[%s135 + $0x628] sm:$0xff] %v2639
        %2928 = vst [vmem:[%s135 + $0x630] sm:$0xff] %v2640
        %2929 = vst [vmem:[%s135 + $0x638] sm:$0xff] %v2641
        %2930 = vst [vmem:[%s135 + $0x640] sm:$0xff] %v2642
        %2931 = vst [vmem:[%s135 + $0x648] sm:$0xff] %v2643
        %2932 = vst [vmem:[%s135 + $0x650] sm:$0xff] %v2644
        %2933 = vst [vmem:[%s135 + $0x658] sm:$0xff] %v2645
        %2934 = vst [vmem:[%s135 + $0x660] sm:$0xff] %v2646
        %2935 = vst [vmem:[%s135 + $0x668] sm:$0xff] %v2647
        %2936 = vst [vmem:[%s135 + $0x670] sm:$0xff] %v2648
        %2937 = vst [vmem:[%s135 + $0x678] sm:$0xff] %v2649
        %2938 = vst [vmem:[%s135 + $0x680] sm:$0xff] %v2650
        %2939 = vst [vmem:[%s135 + $0x688] sm:$0xff] %v2651
        %2940 = vst [vmem:[%s135 + $0x690] sm:$0xff] %v2652
        %2941 = vst [vmem:[%s135 + $0x698] sm:$0xff] %v2653
        %2942 = vst [vmem:[%s135 + $0x6a0] sm:$0xff] %v2654
        %2943 = vst [vmem:[%s135 + $0x6a8] sm:$0xff] %v2655
        %2944 = vst [vmem:[%s135 + $0x6b0] sm:$0xff] %v2656
        %2945 = vst [vmem:[%s135 + $0x6b8] sm:$0xff] %v2657
        %2946 = vst [vmem:[%s135 + $0x6c0] sm:$0xff] %v2658
        %2947 = vst [vmem:[%s135 + $0x6c8] sm:$0xff] %v2659
        %2948 = vst [vmem:[%s135 + $0x6d0] sm:$0xff] %v2660
        %2949 = vst [vmem:[%s135 + $0x6d8] sm:$0xff] %v2661
        %2950 = vst [vmem:[%s135 + $0x6e0] sm:$0xff] %v2662
        %2951 = vst [vmem:[%s135 + $0x6e8] sm:$0xff] %v2663
        %2952 = vst [vmem:[%s135 + $0x6f0] sm:$0xff] %v2664
        %2953 = vst [vmem:[%s135 + $0x6f8] sm:$0xff] %v2665
        %2954 = vst [vmem:[%s135 + $0x700] sm:$0xff] %v2666
        %2955 = vst [vmem:[%s135 + $0x708] sm:$0xff] %v2667
        %2956 = vst [vmem:[%s135 + $0x710] sm:$0xff] %v2668
        %2957 = vst [vmem:[%s135 + $0x718] sm:$0xff] %v2669
        %2958 = vst [vmem:[%s135 + $0x720] sm:$0xff] %v2670
        %2959 = vst [vmem:[%s135 + $0x728] sm:$0xff] %v2671
        %2960 = vst [vmem:[%s135 + $0x730] sm:$0xff] %v2672
        %2961 = vst [vmem:[%s135 + $0x738] sm:$0xff] %v2673
        %2962 = vst [vmem:[%s135 + $0x740] sm:$0xff] %v2674
        %2963 = vst [vmem:[%s135 + $0x748] sm:$0xff] %v2675
        %2964 = vst [vmem:[%s135 + $0x750] sm:$0xff] %v2676
        %2965 = vst [vmem:[%s135 + $0x758] sm:$0xff] %v2677
        %2966 = vst [vmem:[%s135 + $0x760] sm:$0xff] %v2678
        %2967 = vst [vmem:[%s135 + $0x768] sm:$0xff] %v2679
        %2968 = vst [vmem:[%s135 + $0x770] sm:$0xff] %v2680
        %2969 = vst [vmem:[%s135 + $0x778] sm:$0xff] %v2681
        %2970 = vst [vmem:[%s135 + $0x780] sm:$0xff] %v2682
        %2971 = vst [vmem:[%s135 + $0x788] sm:$0xff] %v2683
        %2972 = vst [vmem:[%s135 + $0x790] sm:$0xff] %v2684
        %2973 = vst [vmem:[%s135 + $0x798] sm:$0xff] %v2685
        %2974 = vst [vmem:[%s135 + $0x7a0] sm:$0xff] %v2686
        %2975 = vst [vmem:[%s135 + $0x7a8] sm:$0xff] %v2687
        %2976 = vst [vmem:[%s135 + $0x7b0] sm:$0xff] %v2688
        %2977 = vst [vmem:[%s135 + $0x7b8] sm:$0xff] %v2689
        %2978 = vst [vmem:[%s135 + $0x7c0] sm:$0xff] %v2690
        %2979 = vst [vmem:[%s135 + $0x7c8] sm:$0xff] %v2691
        %2980 = vst [vmem:[%s135 + $0x7d0] sm:$0xff] %v2692
        %2981 = vst [vmem:[%s135 + $0x7d8] sm:$0xff] %v2693
        %2982 = vst [vmem:[%s135 + $0x7e0] sm:$0xff] %v2694
        %2983 = vst [vmem:[%s135 + $0x7e8] sm:$0xff] %v2695
        %2984 = vst [vmem:[%s135 + $0x7f0] sm:$0xff] %v2696
        %2985 = vst [vmem:[%s135 + $0x7f8] sm:$0xff] %v2697
        %2986 = vst [vmem:[%s135 + $0x800] sm:$0xff] %v2698
        %2987 = vst [vmem:[%s135 + $0x808] sm:$0xff] %v2699
        %2988 = vst [vmem:[%s135 + $0x810] sm:$0xff] %v2700
        %2989 = vst [vmem:[%s135 + $0x818] sm:$0xff] %v2701
        %2990 = vst [vmem:[%s135 + $0x820] sm:$0xff] %v2702
        %2991 = vst [vmem:[%s135 + $0x828] sm:$0xff] %v2703
        %2992 = vst [vmem:[%s135 + $0x830] sm:$0xff] %v2704
        %2993 = vst [vmem:[%s135 + $0x838] sm:$0xff] %v2705
        %2994 = vst [vmem:[%s135 + $0x840] sm:$0xff] %v2706
        %2995 = vst [vmem:[%s135 + $0x848] sm:$0xff] %v2707
        %2996 = vst [vmem:[%s135 + $0x850] sm:$0xff] %v2708
        %2997 = vst [vmem:[%s135 + $0x858] sm:$0xff] %v2709
        %2998 = vst [vmem:[%s135 + $0x860] sm:$0xff] %v2710
        %2999 = vst [vmem:[%s135 + $0x868] sm:$0xff] %v2711
        %3000 = vst [vmem:[%s135 + $0x870] sm:$0xff] %v2712
        %3001 = vst [vmem:[%s135 + $0x878] sm:$0xff] %v2713
        %3002 = vst [vmem:[%s135 + $0x880] sm:$0xff] %v2714
        %3003 = vst [vmem:[%s135 + $0x888] sm:$0xff] %v2715
        %3004 = vst [vmem:[%s135 + $0x890] sm:$0xff] %v2716
        %3005 = vst [vmem:[%s135 + $0x898] sm:$0xff] %v2717
        %3006 = vst [vmem:[%s135 + $0x8a0] sm:$0xff] %v2718
        %3007 = vst [vmem:[%s135 + $0x8a8] sm:$0xff] %v2719
        %3008 = vst [vmem:[%s135 + $0x8b0] sm:$0xff] %v2720
        %3009 = vst [vmem:[%s135 + $0x8b8] sm:$0xff] %v2721
        %3010 = vst [vmem:[%s135 + $0x8c0] sm:$0xff] %v2722
        %3011 = vst [vmem:[%s135 + $0x8c8] sm:$0xff] %v2723
        %3012 = vst [vmem:[%s135 + $0x8d0] sm:$0xff] %v2724
        %3013 = vst [vmem:[%s135 + $0x8d8] sm:$0xff] %v2725
        %3014 = vst [vmem:[%s135 + $0x8e0] sm:$0xff] %v2726
        %3015 = vst [vmem:[%s135 + $0x8e8] sm:$0xff] %v2727
        %3016 = vst [vmem:[%s135 + $0x8f0] sm:$0xff] %v2728
        %3017 = vst [vmem:[%s135 + $0x8f8] sm:$0xff] %v2729
        %s3018 = sand.u32 %s52, 1
        %s3019 = scalar_lea.sflag [#allocation4], %s3018
        %s3020 = sand.u32 %s52, 1
        %s3021 = smul.addr %s3020, 2304
        %s3022 = scalar_lea.vmem [#allocation5], %s3021
        // Predicated region
        $region29: #{tpu_custom_call.1} parent=23 // pred_check
          %p3023 = pneg %p62
        $region30: #{tpu_custom_call.1} parent=23 // pred_check_branch
          %3025 = sbr.rel (%p3023) target = $region32
        $region31: #{tpu_custom_call.1} parent=23 // pred_region
          %s3026 = smul.u32 96, %s18
          %s3028 = ssub.s32 36864, 36864
          %3029 = vsyncadd %s3019, %s3028
          %s3030 = smul.addr %s3026, 3
          %s3031 = smul.addr %s3030, 128
          %s3032 = scalar_lea.hbm %s1, %s3031
          %s3033 = sshll.u32 %s3022, 4
          %s3034 = int_to_ptr.vmem [resolvable:$true] %s3033
          %3039 = dma.vmem_to_hbm [thread:$0]  %s3034, 36864, %s3032, %s3019, 384, 384, 24
        $region32: #{tpu_custom_call.1} parent=23 // pred_fallthru
          _
      $region24: #{tpu_custom_call.1} parent=5 // pred_fallthru
        _
      %p3040 = scmp.le.s32.totalorder 2, %s13
      // Predicated region
      $region33: #{tpu_custom_call.1} parent=5 // pred_check
        %p3041 = pneg %p3040
      $region34: #{tpu_custom_call.1} parent=5 // pred_check_branch
        %3043 = sbr.rel (%p3041) target = $region36
      $region35: #{tpu_custom_call.1} parent=5 // pred_region
        %s3044 = ssub.s32 %s13, 2
        // Predicated region
        $region37: #{tpu_custom_call.1} parent=35 // pred_check
          %p3045 = pneg %p68
        $region38: #{tpu_custom_call.1} parent=35 // pred_check_branch
          %3047 = sbr.rel (%p3045) target = $region40
        $region39: #{tpu_custom_call.1} parent=35 // pred_region
          %s3048 = sand.u32 %s53, 1
          %s3049 = scalar_lea.sflag [#allocation4], %s3048
          %s3050 = sand.u32 %s53, 1
          %s3051 = smul.addr %s3050, 2304
          %s3052 = scalar_lea.vmem [#allocation5], %s3051
          %3053 = dma.done %s3049, 36864
        $region40: #{tpu_custom_call.1} parent=35 // pred_fallthru
          _
      $region36: #{tpu_custom_call.1} parent=5 // pred_fallthru
        _
    $region6: #{tpu_custom_call.1} parent=1 // loop_footer
      %s17 = sadd.s32 1, %s13
    $region7: #{tpu_custom_call.1} parent=1 // loop_footer_branch
      %12 = sbr.rel target = $region3
    $region8: #{tpu_custom_call.1} parent=1 // loop_exit
      _
    %3054 = vsyncpa [#allocation3], 1
    %s3055 = scalar_lea.sflag [#allocation3], 1
    %3056 = vsyncpa %s3055, 1
    %3057 = vsyncpa [#allocation4], 1
    %s3058 = scalar_lea.sflag [#allocation4], 1
    %3059 = vsyncpa %s3058, 1

</llo_original>
